<compile_context>
chip_gen: v6e
topology: v6e:2x2x1
jax: 0.10.0
libtpu: 0.0.40
codegen_flags: <defaults>
</compile_context>

<pallas_src>
import functools

import jax
import jax.numpy as jnp
import numpy as np
from jax.experimental import pallas as pl
from jax.experimental.pallas import tpu as pltpu


def ca_kernel(x_ref, w1_ref, b1_ref, w2_ref, b2_ref,
              w3_ref, b3_ref, w4_ref, b4_ref, mask_ref,
              o_ref, pad_ref, stack_ref, *, W, base):
    # x_ref block : (1, C, H*W)            lane-dense (H*W on lanes), f32
    # pad_ref     : (C, base + HW + halo)  f32 halo scratch, image at lane
    #                                      offset `base` (multiple of 128)
    # stack_ref   : (9*C, HW)              f32 stacked-tap staging operand
    # mask_ref    : (2, HW)                0/1 column-validity masks
    _, C, HW = x_ref.shape
    Lp = pad_ref.shape[1]

    x_img = x_ref[0]                                     # (C, HW) f32

    # Zero only the two halo regions (aligned stores) — the interior is always
    # fully overwritten.  Done unconditionally every grid step so it is safe
    # with "parallel" batch semantics (per-core scratch).
    pad_ref[:, :base] = jnp.zeros((C, base), jnp.float32)
    pad_ref[:, base + HW:] = jnp.zeros((C, Lp - base - HW), jnp.float32)

    # Host-precomputed column masks (loop-invariant; no iota/%/compare here).
    m_first = mask_ref[0:1, :]                           # (1, HW): col != 0
    m_last = mask_ref[1:2, :]                            # (1, HW): col != W-1

    def build_stack(img):
        """Write the 9 masked, shifted taps of `img` into stack_ref (9C, HW)."""
        pad_ref[:, base: base + HW] = img
        for t in range(9):
            dh, dw = divmod(t, 3)
            s = (dh - 1) * W + (dw - 1)
            v = pad_ref[:, base + s: base + s + HW]      # (C, HW)
            if dw == 0:                                  # kill row wrap-around
                v = v * m_first
            elif dw == 2:
                v = v * m_last
            stack_ref[t * C:(t + 1) * C, :] = v

    # ---- conv1 (3x3): single (C, 9C) @ (9C, HW) bf16 MXU dot, f32 acc ----
    build_stack(x_img)
    acc = jnp.dot(w1_ref[...], stack_ref[...].astype(jnp.bfloat16),
                  preferred_element_type=jnp.float32)    # (C, HW) f32
    y1 = jnp.maximum(acc + b1_ref[...], 0.0)             # (C, HW) f32

    # ---- gap(conv2(y1)): conv2 is linear and only its spatial mean is used.
    # One lane reduction of the stacked taps (f32) + one tiny bf16 matvec.
    build_stack(y1)
    tap_sums = jnp.sum(stack_ref[...], axis=1, keepdims=True)       # (9C, 1) f32
    gap = (jnp.dot(w2_ref[...], tap_sums.astype(jnp.bfloat16),
                   preferred_element_type=jnp.float32) * (1.0 / HW)
           + b2_ref[...])                                # (C, 1) f32

    # ---- conv_du: 1x1 -> relu -> 1x1 -> sigmoid (tiny f32 matvecs) ----
    hid = jnp.maximum(
        jnp.dot(w3_ref[...], gap, preferred_element_type=jnp.float32)
        + b3_ref[...], 0.0)                              # (Cr, 1)
    pre = (jnp.dot(w4_ref[...], hid, preferred_element_type=jnp.float32)
           + b4_ref[...])                                # (C, 1)
    z = 1.0 / (1.0 + jnp.exp(-pre))                      # sigmoid

    # ---- z * gap + x  (per-channel scale broadcast along lanes) ----
    o_ref[0] = (x_img + z * gap).astype(o_ref.dtype)


def ca_layer_pallas(x_nchw, params):
    """x_nchw: (N, C, H, W) float32.  Returns (N, C, H, W)."""
    w1, b1, w2, b2, w3, b3, w4, b4 = params
    N, C, H, W = x_nchw.shape
    Cr = w3.shape[1]
    HW = H * W

    # Host-side weight packing (done once).  Per-tap (Cout, Cin) matrices are
    # flattened so row co, column t*C+ci matches stack row t*C+ci:
    #   w_pack[co, t*C + ci] = w[dh, dw, ci, co],  t = dh*3 + dw
    w1k = jnp.transpose(w1.reshape(9, C, C), (2, 0, 1)).reshape(C, 9 * C)
    w1k = w1k.astype(jnp.bfloat16)                                 # conv1, bf16
    w2k = jnp.transpose(w2.reshape(9, C, C), (2, 0, 1)).reshape(C, 9 * C)
    w2k = w2k.astype(jnp.bfloat16)                                 # gap matvec, bf16
    b1k = b1.reshape(C, 1)
    b2k = b2.reshape(C, 1)
    w3k = jnp.transpose(w3)                                        # (Cr, C) f32
    b3k = b3.reshape(Cr, 1)
    w4k = jnp.transpose(w4)                                        # (C, Cr) f32
    b4k = b4.reshape(C, 1)

    # Host-precomputed column-validity masks (1.0 = valid), resident in VMEM.
    col = np.arange(HW) % W
    masks = jnp.asarray(np.stack([(col != 0), (col != W - 1)]).astype(np.float32))

    # Free reshape (no transpose, no data movement): NCHW -> (N, C, H*W).
    x_flat = x_nchw.reshape(N, C, HW)

    base = ((W + 1 + 127) // 128) * 128                  # aligned interior offset
    scratch_lanes = ((base + HW + W + 1 + 127) // 128) * 128

    kernel = functools.partial(ca_kernel, W=W, base=base)

    out = pl.pallas_call(
        kernel,
        out_shape=jax.ShapeDtypeStruct((N, C, HW), x_flat.dtype),
        grid_spec=pltpu.PrefetchScalarGridSpec(
            num_scalar_prefetch=0,
            grid=(N,),
            in_specs=[
                pl.BlockSpec((1, C, HW), lambda n: (n, 0, 0)),     # x
                pl.BlockSpec((C, 9 * C), lambda n: (0, 0)),        # w1 packed bf16
                pl.BlockSpec((C, 1), lambda n: (0, 0)),            # b1
                pl.BlockSpec((C, 9 * C), lambda n: (0, 0)),        # w2 packed bf16
                pl.BlockSpec((C, 1), lambda n: (0, 0)),            # b2
                pl.BlockSpec((Cr, C), lambda n: (0, 0)),           # w3^T
                pl.BlockSpec((Cr, 1), lambda n: (0, 0)),           # b3
                pl.BlockSpec((C, Cr), lambda n: (0, 0)),           # w4^T
                pl.BlockSpec((C, 1), lambda n: (0, 0)),            # b4
                pl.BlockSpec((2, HW), lambda n: (0, 0)),           # column masks
            ],
            out_specs=pl.BlockSpec((1, C, HW), lambda n: (n, 0, 0)),
            scratch_shapes=[
                pltpu.VMEM((C, scratch_lanes), jnp.float32),       # halo pad
                pltpu.VMEM((9 * C, HW), jnp.float32),              # stacked taps
            ],
        ),
        compiler_params=pltpu.CompilerParams(
            dimension_semantics=("parallel",)),          # v7x: 2 TCs share batch
    )(x_flat, w1k, b1k, w2k, b2k, w3k, b3k, w4k, b4k, masks)

    return out.reshape(N, C, H, W)                       # free reshape back


def ca_layer_reference(x_nchw, params):
    """Pure-JAX reference (mirrors the PyTorch module: z * gap + x)."""
    w1, b1, w2, b2, w3, b3, w4, b4 = params
    x = jnp.transpose(x_nchw, (0, 2, 3, 1))
    dn = ('NHWC', 'HWIO', 'NHWC')
    y = jax.lax.conv_general_dilated(x, w1, (1, 1), 'SAME',
                                     dimension_numbers=dn) + b1.reshape(1, 1, 1, -1)
    y = jnp.maximum(y, 0.0)
    y = jax.lax.conv_general_dilated(y, w2, (1, 1), 'SAME',
                                     dimension_numbers=dn) + b2.reshape(1, 1, 1, -1)
    gap = jnp.mean(y, axis=(1, 2), keepdims=True)                      # (N,1,1,C)
    hid = jnp.maximum(jnp.einsum('nijc,cd->nijd', gap, w3)
                      + b3.reshape(1, 1, 1, -1), 0.0)
    z = jax.nn.sigmoid(jnp.einsum('nijd,dc->nijc', hid, w4)
                       + b4.reshape(1, 1, 1, -1))
    out = z * gap + x
    return jnp.transpose(out, (0, 3, 1, 2))


if __name__ == "__main__":
    N, C, H, W = 2, 4, 16, 16
    reduction = 2
    Cr = C // reduction

    key = jax.random.PRNGKey(0)
    ks = jax.random.split(key, 9)
    # deterministic synthetic parameters (shapes follow CALayer.__init__)
    w1 = 0.1 * jax.random.normal(ks[0], (3, 3, C, C), jnp.float32)   # HWIO
    b1 = 0.1 * jax.random.normal(ks[1], (C,), jnp.float32)
    w2 = 0.1 * jax.random.normal(ks[2], (3, 3, C, C), jnp.float32)   # HWIO
    b2 = 0.1 * jax.random.normal(ks[3], (C,), jnp.float32)
    w3 = 0.1 * jax.random.normal(ks[4], (C, Cr), jnp.float32)        # 1x1: C -> C//r
    b3 = 0.1 * jax.random.normal(ks[5], (Cr,), jnp.float32)
    w4 = 0.1 * jax.random.normal(ks[6], (Cr, C), jnp.float32)        # 1x1: C//r -> C
    b4 = 0.1 * jax.random.normal(ks[7], (C,), jnp.float32)
    params = (w1, b1, w2, b2, w3, b3, w4, b4)

    x = jax.random.normal(ks[8], (N, C, H, W), jnp.float32)          # NCHW input

    out = ca_layer_pallas(x, params)
    out = jax.block_until_ready(out)

    ref = jax.block_until_ready(ca_layer_reference(x, params))
    np.testing.assert_allclose(np.asarray(out), np.asarray(ref),
                               rtol=2e-2, atol=2e-2)

    print("KERNEL_OK")
</pallas_src>

<mosaic_0001>
module attributes {stable_mosaic.version = 11 : i64} {
  func.func @ca_kernel(%arg0: i32, %arg1: memref<1x4x256xf32, #tpu.memory_space<vmem>>, %arg2: memref<4x36xbf16, #tpu.memory_space<vmem>>, %arg3: memref<4x1xf32, #tpu.memory_space<vmem>>, %arg4: memref<4x36xbf16, #tpu.memory_space<vmem>>, %arg5: memref<4x1xf32, #tpu.memory_space<vmem>>, %arg6: memref<2x4xf32, #tpu.memory_space<vmem>>, %arg7: memref<2x1xf32, #tpu.memory_space<vmem>>, %arg8: memref<4x2xf32, #tpu.memory_space<vmem>>, %arg9: memref<4x1xf32, #tpu.memory_space<vmem>>, %arg10: memref<2x256xf32, #tpu.memory_space<vmem>>, %arg11: memref<1x4x256xf32, #tpu.memory_space<vmem>>, %arg12: memref<4x512xf32, #tpu.memory_space<vmem>>, %arg13: memref<36x256xf32, #tpu.memory_space<vmem>>) attributes {dimension_semantics = [#tpu.dimension_semantics<parallel>], iteration_bounds = array<i64: 2>, scalar_prefetch = 0 : i64, scratch_operands = 2 : i64, tpu.core_type = #tpu.core_type<tc>, window_params = [{transform_indices = @transform_0, window_bounds = array<i64: 1, 4, 256>}, {pipeline_mode = #tpu.pipeline_mode<synchronous>, transform_indices = @transform_1, window_bounds = array<i64: 4, 36>}, {pipeline_mode = #tpu.pipeline_mode<synchronous>, transform_indices = @transform_2, window_bounds = array<i64: 4, 1>}, {pipeline_mode = #tpu.pipeline_mode<synchronous>, transform_indices = @transform_3, window_bounds = array<i64: 4, 36>}, {pipeline_mode = #tpu.pipeline_mode<synchronous>, transform_indices = @transform_4, window_bounds = array<i64: 4, 1>}, {pipeline_mode = #tpu.pipeline_mode<synchronous>, transform_indices = @transform_5, window_bounds = array<i64: 2, 4>}, {pipeline_mode = #tpu.pipeline_mode<synchronous>, transform_indices = @transform_6, window_bounds = array<i64: 2, 1>}, {pipeline_mode = #tpu.pipeline_mode<synchronous>, transform_indices = @transform_7, window_bounds = array<i64: 4, 2>}, {pipeline_mode = #tpu.pipeline_mode<synchronous>, transform_indices = @transform_8, window_bounds = array<i64: 4, 1>}, {pipeline_mode = #tpu.pipeline_mode<synchronous>, transform_indices = @transform_9, window_bounds = array<i64: 2, 256>}, {transform_indices = @transform_10, window_bounds = array<i64: 1, 4, 256>}]} {
    %c0 = arith.constant 0 : index
    %c0_0 = arith.constant 0 : index
    %c0_1 = arith.constant 0 : index
    %0 = vector.load %arg1[%c0, %c0_0, %c0_1] : memref<1x4x256xf32, #tpu.memory_space<vmem>>, vector<1x4x256xf32>
    %1 = vector.shape_cast %0 : vector<1x4x256xf32> to vector<4x256xf32>
    %cst = arith.constant 0.000000e+00 : f32
    %2 = vector.broadcast %cst : f32 to vector<4x128xf32>
    %c0_2 = arith.constant 0 : index
    %c0_3 = arith.constant 0 : index
    %3 = vector.load %arg12[%c0_2, %c0_3] : memref<4x512xf32, #tpu.memory_space<vmem>>, vector<4x128xf32>
    tpu.vector_store %arg12[%c0_2, %c0_3], %2 {strides = array<i32>} : memref<4x512xf32, #tpu.memory_space<vmem>>, vector<4x128xf32>,
    %cst_4 = arith.constant 0.000000e+00 : f32
    %4 = vector.broadcast %cst_4 : f32 to vector<4x128xf32>
    %c0_5 = arith.constant 0 : index
    %c384 = arith.constant 384 : index
    %5 = vector.load %arg12[%c0_5, %c384] : memref<4x512xf32, #tpu.memory_space<vmem>>, vector<4x128xf32>
    tpu.vector_store %arg12[%c0_5, %c384], %4 {strides = array<i32>} : memref<4x512xf32, #tpu.memory_space<vmem>>, vector<4x128xf32>,
    %c0_6 = arith.constant 0 : index
    %c0_7 = arith.constant 0 : index
    %6 = vector.load %arg10[%c0_6, %c0_7] : memref<2x256xf32, #tpu.memory_space<vmem>>, vector<1x256xf32>
    %c1 = arith.constant 1 : index
    %c0_8 = arith.constant 0 : index
    %7 = vector.load %arg10[%c1, %c0_8] : memref<2x256xf32, #tpu.memory_space<vmem>>, vector<1x256xf32>
    %c0_9 = arith.constant 0 : index
    %c128 = arith.constant 128 : index
    %8 = vector.load %arg12[%c0_9, %c128] : memref<4x512xf32, #tpu.memory_space<vmem>>, vector<4x256xf32>
    tpu.vector_store %arg12[%c0_9, %c128], %1 {strides = array<i32>} : memref<4x512xf32, #tpu.memory_space<vmem>>, vector<4x256xf32>,
    %c0_10 = arith.constant 0 : index
    %c111 = arith.constant 111 : index
    %9 = vector.load %arg12[%c0_10, %c111] : memref<4x512xf32, #tpu.memory_space<vmem>>, vector<4x256xf32>
    %10 = vector.broadcast %6 : vector<1x256xf32> to vector<4x256xf32>
    %11 = arith.mulf %9, %10 : vector<4x256xf32>
    %c0_11 = arith.constant 0 : index
    %c0_12 = arith.constant 0 : index
    %12 = vector.load %arg13[%c0_11, %c0_12] : memref<36x256xf32, #tpu.memory_space<vmem>>, vector<4x256xf32>
    tpu.vector_store %arg13[%c0_11, %c0_12], %11 {strides = array<i32>} : memref<36x256xf32, #tpu.memory_space<vmem>>, vector<4x256xf32>,
    %c0_13 = arith.constant 0 : index
    %c112 = arith.constant 112 : index
    %13 = vector.load %arg12[%c0_13, %c112] : memref<4x512xf32, #tpu.memory_space<vmem>>, vector<4x256xf32>
    %c4 = arith.constant 4 : index
    %c0_14 = arith.constant 0 : index
    %14 = vector.load %arg13[%c4, %c0_14] : memref<36x256xf32, #tpu.memory_space<vmem>>, vector<4x256xf32>
    tpu.vector_store %arg13[%c4, %c0_14], %13 {strides = array<i32>} : memref<36x256xf32, #tpu.memory_space<vmem>>, vector<4x256xf32>,
    %c0_15 = arith.constant 0 : index
    %c113 = arith.constant 113 : index
    %15 = vector.load %arg12[%c0_15, %c113] : memref<4x512xf32, #tpu.memory_space<vmem>>, vector<4x256xf32>
    %16 = vector.broadcast %7 : vector<1x256xf32> to vector<4x256xf32>
    %17 = arith.mulf %15, %16 : vector<4x256xf32>
    %c8 = arith.constant 8 : index
    %c0_16 = arith.constant 0 : index
    %18 = vector.load %arg13[%c8, %c0_16] : memref<36x256xf32, #tpu.memory_space<vmem>>, vector<4x256xf32>
    tpu.vector_store %arg13[%c8, %c0_16], %17 {strides = array<i32>} : memref<36x256xf32, #tpu.memory_space<vmem>>, vector<4x256xf32>,
    %c0_17 = arith.constant 0 : index
    %c127 = arith.constant 127 : index
    %19 = vector.load %arg12[%c0_17, %c127] : memref<4x512xf32, #tpu.memory_space<vmem>>, vector<4x256xf32>
    %20 = vector.broadcast %6 : vector<1x256xf32> to vector<4x256xf32>
    %21 = arith.mulf %19, %20 : vector<4x256xf32>
    %c12 = arith.constant 12 : index
    %c0_18 = arith.constant 0 : index
    %22 = vector.load %arg13[%c12, %c0_18] : memref<36x256xf32, #tpu.memory_space<vmem>>, vector<4x256xf32>
    tpu.vector_store %arg13[%c12, %c0_18], %21 {strides = array<i32>} : memref<36x256xf32, #tpu.memory_space<vmem>>, vector<4x256xf32>,
    %c0_19 = arith.constant 0 : index
    %c128_20 = arith.constant 128 : index
    %23 = vector.load %arg12[%c0_19, %c128_20] : memref<4x512xf32, #tpu.memory_space<vmem>>, vector<4x256xf32>
    %c16 = arith.constant 16 : index
    %c0_21 = arith.constant 0 : index
    %24 = vector.load %arg13[%c16, %c0_21] : memref<36x256xf32, #tpu.memory_space<vmem>>, vector<4x256xf32>
    tpu.vector_store %arg13[%c16, %c0_21], %23 {strides = array<i32>} : memref<36x256xf32, #tpu.memory_space<vmem>>, vector<4x256xf32>,
    %c0_22 = arith.constant 0 : index
    %c129 = arith.constant 129 : index
    %25 = vector.load %arg12[%c0_22, %c129] : memref<4x512xf32, #tpu.memory_space<vmem>>, vector<4x256xf32>
    %26 = vector.broadcast %7 : vector<1x256xf32> to vector<4x256xf32>
    %27 = arith.mulf %25, %26 : vector<4x256xf32>
    %c20 = arith.constant 20 : index
    %c0_23 = arith.constant 0 : index
    %28 = vector.load %arg13[%c20, %c0_23] : memref<36x256xf32, #tpu.memory_space<vmem>>, vector<4x256xf32>
    tpu.vector_store %arg13[%c20, %c0_23], %27 {strides = array<i32>} : memref<36x256xf32, #tpu.memory_space<vmem>>, vector<4x256xf32>,
    %c0_24 = arith.constant 0 : index
    %c143 = arith.constant 143 : index
    %29 = vector.load %arg12[%c0_24, %c143] : memref<4x512xf32, #tpu.memory_space<vmem>>, vector<4x256xf32>
    %30 = vector.broadcast %6 : vector<1x256xf32> to vector<4x256xf32>
    %31 = arith.mulf %29, %30 : vector<4x256xf32>
    %c24 = arith.constant 24 : index
    %c0_25 = arith.constant 0 : index
    %32 = vector.load %arg13[%c24, %c0_25] : memref<36x256xf32, #tpu.memory_space<vmem>>, vector<4x256xf32>
    tpu.vector_store %arg13[%c24, %c0_25], %31 {strides = array<i32>} : memref<36x256xf32, #tpu.memory_space<vmem>>, vector<4x256xf32>,
    %c0_26 = arith.constant 0 : index
    %c144 = arith.constant 144 : index
    %33 = vector.load %arg12[%c0_26, %c144] : memref<4x512xf32, #tpu.memory_space<vmem>>, vector<4x256xf32>
    %c28 = arith.constant 28 : index
    %c0_27 = arith.constant 0 : index
    %34 = vector.load %arg13[%c28, %c0_27] : memref<36x256xf32, #tpu.memory_space<vmem>>, vector<4x256xf32>
    tpu.vector_store %arg13[%c28, %c0_27], %33 {strides = array<i32>} : memref<36x256xf32, #tpu.memory_space<vmem>>, vector<4x256xf32>,
    %c0_28 = arith.constant 0 : index
    %c145 = arith.constant 145 : index
    %35 = vector.load %arg12[%c0_28, %c145] : memref<4x512xf32, #tpu.memory_space<vmem>>, vector<4x256xf32>
    %36 = vector.broadcast %7 : vector<1x256xf32> to vector<4x256xf32>
    %37 = arith.mulf %35, %36 : vector<4x256xf32>
    %c32 = arith.constant 32 : index
    %c0_29 = arith.constant 0 : index
    %38 = vector.load %arg13[%c32, %c0_29] : memref<36x256xf32, #tpu.memory_space<vmem>>, vector<4x256xf32>
    tpu.vector_store %arg13[%c32, %c0_29], %37 {strides = array<i32>} : memref<36x256xf32, #tpu.memory_space<vmem>>, vector<4x256xf32>,
    %c0_30 = arith.constant 0 : index
    %c0_31 = arith.constant 0 : index
    %39 = vector.load %arg2[%c0_30, %c0_31] : memref<4x36xbf16, #tpu.memory_space<vmem>>, vector<4x36xbf16>
    %c0_32 = arith.constant 0 : index
    %c0_33 = arith.constant 0 : index
    %40 = vector.load %arg13[%c0_32, %c0_33] : memref<36x256xf32, #tpu.memory_space<vmem>>, vector<36x256xf32>
    %41 = arith.truncf %40 : vector<36x256xf32> to vector<36x256xbf16>
    %cst_34 = arith.constant dense<0.000000e+00> : vector<4x256xf32>
    %42 = tpu.matmul %39, %41, %cst_34 {dimension_numbers = #tpu.dot_dimension_numbers<[1], [0], [0], [1], [0, 0, 1, 1], [], []>} : vector<4x36xbf16>, vector<36x256xbf16>, vector<4x256xf32> -> vector<4x256xf32>
    %c0_35 = arith.constant 0 : index
    %c0_36 = arith.constant 0 : index
    %43 = vector.load %arg3[%c0_35, %c0_36] : memref<4x1xf32, #tpu.memory_space<vmem>>, vector<4x1xf32>
    %44 = vector.broadcast %43 : vector<4x1xf32> to vector<4x256xf32>
    %45 = arith.addf %42, %44 : vector<4x256xf32>
    %cst_37 = arith.constant 0.000000e+00 : f32
    %46 = vector.broadcast %cst_37 : f32 to vector<4x256xf32>
    %47 = arith.maximumf %45, %46 : vector<4x256xf32>
    %c0_38 = arith.constant 0 : index
    %c128_39 = arith.constant 128 : index
    %48 = vector.load %arg12[%c0_38, %c128_39] : memref<4x512xf32, #tpu.memory_space<vmem>>, vector<4x256xf32>
    tpu.vector_store %arg12[%c0_38, %c128_39], %47 {strides = array<i32>} : memref<4x512xf32, #tpu.memory_space<vmem>>, vector<4x256xf32>,
    %c0_40 = arith.constant 0 : index
    %c111_41 = arith.constant 111 : index
    %49 = vector.load %arg12[%c0_40, %c111_41] : memref<4x512xf32, #tpu.memory_space<vmem>>, vector<4x256xf32>
    %50 = vector.broadcast %6 : vector<1x256xf32> to vector<4x256xf32>
    %51 = arith.mulf %49, %50 : vector<4x256xf32>
    %c0_42 = arith.constant 0 : index
    %c0_43 = arith.constant 0 : index
    %52 = vector.load %arg13[%c0_42, %c0_43] : memref<36x256xf32, #tpu.memory_space<vmem>>, vector<4x256xf32>
    tpu.vector_store %arg13[%c0_42, %c0_43], %51 {strides = array<i32>} : memref<36x256xf32, #tpu.memory_space<vmem>>, vector<4x256xf32>,
    %c0_44 = arith.constant 0 : index
    %c112_45 = arith.constant 112 : index
    %53 = vector.load %arg12[%c0_44, %c112_45] : memref<4x512xf32, #tpu.memory_space<vmem>>, vector<4x256xf32>
    %c4_46 = arith.constant 4 : index
    %c0_47 = arith.constant 0 : index
    %54 = vector.load %arg13[%c4_46, %c0_47] : memref<36x256xf32, #tpu.memory_space<vmem>>, vector<4x256xf32>
    tpu.vector_store %arg13[%c4_46, %c0_47], %53 {strides = array<i32>} : memref<36x256xf32, #tpu.memory_space<vmem>>, vector<4x256xf32>,
    %c0_48 = arith.constant 0 : index
    %c113_49 = arith.constant 113 : index
    %55 = vector.load %arg12[%c0_48, %c113_49] : memref<4x512xf32, #tpu.memory_space<vmem>>, vector<4x256xf32>
    %56 = vector.broadcast %7 : vector<1x256xf32> to vector<4x256xf32>
    %57 = arith.mulf %55, %56 : vector<4x256xf32>
    %c8_50 = arith.constant 8 : index
    %c0_51 = arith.constant 0 : index
    %58 = vector.load %arg13[%c8_50, %c0_51] : memref<36x256xf32, #tpu.memory_space<vmem>>, vector<4x256xf32>
    tpu.vector_store %arg13[%c8_50, %c0_51], %57 {strides = array<i32>} : memref<36x256xf32, #tpu.memory_space<vmem>>, vector<4x256xf32>,
    %c0_52 = arith.constant 0 : index
    %c127_53 = arith.constant 127 : index
    %59 = vector.load %arg12[%c0_52, %c127_53] : memref<4x512xf32, #tpu.memory_space<vmem>>, vector<4x256xf32>
    %60 = vector.broadcast %6 : vector<1x256xf32> to vector<4x256xf32>
    %61 = arith.mulf %59, %60 : vector<4x256xf32>
    %c12_54 = arith.constant 12 : index
    %c0_55 = arith.constant 0 : index
    %62 = vector.load %arg13[%c12_54, %c0_55] : memref<36x256xf32, #tpu.memory_space<vmem>>, vector<4x256xf32>
    tpu.vector_store %arg13[%c12_54, %c0_55], %61 {strides = array<i32>} : memref<36x256xf32, #tpu.memory_space<vmem>>, vector<4x256xf32>,
    %c0_56 = arith.constant 0 : index
    %c128_57 = arith.constant 128 : index
    %63 = vector.load %arg12[%c0_56, %c128_57] : memref<4x512xf32, #tpu.memory_space<vmem>>, vector<4x256xf32>
    %c16_58 = arith.constant 16 : index
    %c0_59 = arith.constant 0 : index
    %64 = vector.load %arg13[%c16_58, %c0_59] : memref<36x256xf32, #tpu.memory_space<vmem>>, vector<4x256xf32>
    tpu.vector_store %arg13[%c16_58, %c0_59], %63 {strides = array<i32>} : memref<36x256xf32, #tpu.memory_space<vmem>>, vector<4x256xf32>,
    %c0_60 = arith.constant 0 : index
    %c129_61 = arith.constant 129 : index
    %65 = vector.load %arg12[%c0_60, %c129_61] : memref<4x512xf32, #tpu.memory_space<vmem>>, vector<4x256xf32>
    %66 = vector.broadcast %7 : vector<1x256xf32> to vector<4x256xf32>
    %67 = arith.mulf %65, %66 : vector<4x256xf32>
    %c20_62 = arith.constant 20 : index
    %c0_63 = arith.constant 0 : index
    %68 = vector.load %arg13[%c20_62, %c0_63] : memref<36x256xf32, #tpu.memory_space<vmem>>, vector<4x256xf32>
    tpu.vector_store %arg13[%c20_62, %c0_63], %67 {strides = array<i32>} : memref<36x256xf32, #tpu.memory_space<vmem>>, vector<4x256xf32>,
    %c0_64 = arith.constant 0 : index
    %c143_65 = arith.constant 143 : index
    %69 = vector.load %arg12[%c0_64, %c143_65] : memref<4x512xf32, #tpu.memory_space<vmem>>, vector<4x256xf32>
    %70 = vector.broadcast %6 : vector<1x256xf32> to vector<4x256xf32>
    %71 = arith.mulf %69, %70 : vector<4x256xf32>
    %c24_66 = arith.constant 24 : index
    %c0_67 = arith.constant 0 : index
    %72 = vector.load %arg13[%c24_66, %c0_67] : memref<36x256xf32, #tpu.memory_space<vmem>>, vector<4x256xf32>
    tpu.vector_store %arg13[%c24_66, %c0_67], %71 {strides = array<i32>} : memref<36x256xf32, #tpu.memory_space<vmem>>, vector<4x256xf32>,
    %c0_68 = arith.constant 0 : index
    %c144_69 = arith.constant 144 : index
    %73 = vector.load %arg12[%c0_68, %c144_69] : memref<4x512xf32, #tpu.memory_space<vmem>>, vector<4x256xf32>
    %c28_70 = arith.constant 28 : index
    %c0_71 = arith.constant 0 : index
    %74 = vector.load %arg13[%c28_70, %c0_71] : memref<36x256xf32, #tpu.memory_space<vmem>>, vector<4x256xf32>
    tpu.vector_store %arg13[%c28_70, %c0_71], %73 {strides = array<i32>} : memref<36x256xf32, #tpu.memory_space<vmem>>, vector<4x256xf32>,
    %c0_72 = arith.constant 0 : index
    %c145_73 = arith.constant 145 : index
    %75 = vector.load %arg12[%c0_72, %c145_73] : memref<4x512xf32, #tpu.memory_space<vmem>>, vector<4x256xf32>
    %76 = vector.broadcast %7 : vector<1x256xf32> to vector<4x256xf32>
    %77 = arith.mulf %75, %76 : vector<4x256xf32>
    %c32_74 = arith.constant 32 : index
    %c0_75 = arith.constant 0 : index
    %78 = vector.load %arg13[%c32_74, %c0_75] : memref<36x256xf32, #tpu.memory_space<vmem>>, vector<4x256xf32>
    tpu.vector_store %arg13[%c32_74, %c0_75], %77 {strides = array<i32>} : memref<36x256xf32, #tpu.memory_space<vmem>>, vector<4x256xf32>,
    %c0_76 = arith.constant 0 : index
    %c0_77 = arith.constant 0 : index
    %79 = vector.load %arg13[%c0_76, %c0_77] : memref<36x256xf32, #tpu.memory_space<vmem>>, vector<36x256xf32>
    %cst_78 = arith.constant dense<0.000000e+00> : vector<36xf32>
    %80 = vector.multi_reduction <add>, %79, %cst_78 [1] : vector<36x256xf32> to vector<36xf32>
    %81 = vector.shape_cast %80 : vector<36xf32> to vector<36x1xf32>
    %c0_79 = arith.constant 0 : index
    %c0_80 = arith.constant 0 : index
    %82 = vector.load %arg4[%c0_79, %c0_80] : memref<4x36xbf16, #tpu.memory_space<vmem>>, vector<4x36xbf16>
    %83 = arith.truncf %81 : vector<36x1xf32> to vector<36x1xbf16>
    %cst_81 = arith.constant dense<0.000000e+00> : vector<4x1xf32>
    %84 = tpu.matmul %82, %83, %cst_81 {dimension_numbers = #tpu.dot_dimension_numbers<[1], [0], [0], [1], [0, 0, 1, 1], [], []>} : vector<4x36xbf16>, vector<36x1xbf16>, vector<4x1xf32> -> vector<4x1xf32>
    %cst_82 = arith.constant 3.906250e-03 : f32
    %85 = vector.broadcast %cst_82 : f32 to vector<4x1xf32>
    %86 = arith.mulf %84, %85 : vector<4x1xf32>
    %c0_83 = arith.constant 0 : index
    %c0_84 = arith.constant 0 : index
    %87 = vector.load %arg5[%c0_83, %c0_84] : memref<4x1xf32, #tpu.memory_space<vmem>>, vector<4x1xf32>
    %88 = arith.addf %86, %87 : vector<4x1xf32>
    %c0_85 = arith.constant 0 : index
    %c0_86 = arith.constant 0 : index
    %89 = vector.load %arg6[%c0_85, %c0_86] : memref<2x4xf32, #tpu.memory_space<vmem>>, vector<2x4xf32>
    %cst_87 = arith.constant dense<0.000000e+00> : vector<2x1xf32>
    %90 = tpu.matmul %89, %88, %cst_87 {dimension_numbers = #tpu.dot_dimension_numbers<[1], [0], [0], [1], [0, 0, 1, 1], [], []>} : vector<2x4xf32>, vector<4x1xf32>, vector<2x1xf32> -> vector<2x1xf32>
    %c0_88 = arith.constant 0 : index
    %c0_89 = arith.constant 0 : index
    %91 = vector.load %arg7[%c0_88, %c0_89] : memref<2x1xf32, #tpu.memory_space<vmem>>, vector<2x1xf32>
    %92 = arith.addf %90, %91 : vector<2x1xf32>
    %cst_90 = arith.constant 0.000000e+00 : f32
    %93 = vector.broadcast %cst_90 : f32 to vector<2x1xf32>
    %94 = arith.maximumf %92, %93 : vector<2x1xf32>
    %c0_91 = arith.constant 0 : index
    %c0_92 = arith.constant 0 : index
    %95 = vector.load %arg8[%c0_91, %c0_92] : memref<4x2xf32, #tpu.memory_space<vmem>>, vector<4x2xf32>
    %cst_93 = arith.constant dense<0.000000e+00> : vector<4x1xf32>
    %96 = tpu.matmul %95, %94, %cst_93 {dimension_numbers = #tpu.dot_dimension_numbers<[1], [0], [0], [1], [0, 0, 1, 1], [], []>} : vector<4x2xf32>, vector<2x1xf32>, vector<4x1xf32> -> vector<4x1xf32>
    %c0_94 = arith.constant 0 : index
    %c0_95 = arith.constant 0 : index
    %97 = vector.load %arg9[%c0_94, %c0_95] : memref<4x1xf32, #tpu.memory_space<vmem>>, vector<4x1xf32>
    %98 = arith.addf %96, %97 : vector<4x1xf32>
    %cst_96 = arith.constant 0.000000e+00 : f32
    %99 = vector.broadcast %cst_96 : f32 to vector<4x1xf32>
    %100 = arith.subf %99, %98 : vector<4x1xf32>
    %101 = math.exp %100 : vector<4x1xf32>
    %cst_97 = arith.constant 1.000000e+00 : f32
    %102 = vector.broadcast %cst_97 : f32 to vector<4x1xf32>
    %103 = arith.addf %102, %101 : vector<4x1xf32>
    %cst_98 = arith.constant 1.000000e+00 : f32
    %104 = vector.broadcast %cst_98 : f32 to vector<4x1xf32>
    %105 = arith.divf %104, %103 : vector<4x1xf32>
    %106 = arith.mulf %105, %88 : vector<4x1xf32>
    %107 = vector.broadcast %106 : vector<4x1xf32> to vector<4x256xf32>
    %108 = arith.addf %1, %107 : vector<4x256xf32>
    %c0_99 = arith.constant 0 : index
    %c0_100 = arith.constant 0 : index
    %c0_101 = arith.constant 0 : index
    %109 = vector.load %arg11[%c0_99, %c0_100, %c0_101] : memref<1x4x256xf32, #tpu.memory_space<vmem>>, vector<1x4x256xf32>
    %110 = vector.shape_cast %109 : vector<1x4x256xf32> to vector<4x256xf32>
    %111 = vector.shape_cast %108 : vector<4x256xf32> to vector<1x4x256xf32>
    tpu.vector_store %arg11[%c0_99, %c0_100, %c0_101], %111 {strides = array<i32>} : memref<1x4x256xf32, #tpu.memory_space<vmem>>, vector<1x4x256xf32>,
    return
  }
  func.func @transform_0(%arg0: i32) -> (i32, i32, i32) {
    %c0_i32 = arith.constant 0 : i32
    %c0_i32_0 = arith.constant 0 : i32
    %c0_i32_1 = arith.constant 0 : i32
    return %arg0, %c0_i32, %c0_i32_0 : i32, i32, i32
  }
  func.func @transform_1(%arg0: i32) -> (i32, i32) {
    %c0_i32 = arith.constant 0 : i32
    %c0_i32_0 = arith.constant 0 : i32
    %c0_i32_1 = arith.constant 0 : i32
    return %c0_i32, %c0_i32_0 : i32, i32
  }
  func.func @transform_2(%arg0: i32) -> (i32, i32) {
    %c0_i32 = arith.constant 0 : i32
    %c0_i32_0 = arith.constant 0 : i32
    %c0_i32_1 = arith.constant 0 : i32
    return %c0_i32, %c0_i32_0 : i32, i32
  }
  func.func @transform_3(%arg0: i32) -> (i32, i32) {
    %c0_i32 = arith.constant 0 : i32
    %c0_i32_0 = arith.constant 0 : i32
    %c0_i32_1 = arith.constant 0 : i32
    return %c0_i32, %c0_i32_0 : i32, i32
  }
  func.func @transform_4(%arg0: i32) -> (i32, i32) {
    %c0_i32 = arith.constant 0 : i32
    %c0_i32_0 = arith.constant 0 : i32
    %c0_i32_1 = arith.constant 0 : i32
    return %c0_i32, %c0_i32_0 : i32, i32
  }
  func.func @transform_5(%arg0: i32) -> (i32, i32) {
    %c0_i32 = arith.constant 0 : i32
    %c0_i32_0 = arith.constant 0 : i32
    %c0_i32_1 = arith.constant 0 : i32
    return %c0_i32, %c0_i32_0 : i32, i32
  }
  func.func @transform_6(%arg0: i32) -> (i32, i32) {
    %c0_i32 = arith.constant 0 : i32
    %c0_i32_0 = arith.constant 0 : i32
    %c0_i32_1 = arith.constant 0 : i32
    return %c0_i32, %c0_i32_0 : i32, i32
  }
  func.func @transform_7(%arg0: i32) -> (i32, i32) {
    %c0_i32 = arith.constant 0 : i32
    %c0_i32_0 = arith.constant 0 : i32
    %c0_i32_1 = arith.constant 0 : i32
    return %c0_i32, %c0_i32_0 : i32, i32
  }
  func.func @transform_8(%arg0: i32) -> (i32, i32) {
    %c0_i32 = arith.constant 0 : i32
    %c0_i32_0 = arith.constant 0 : i32
    %c0_i32_1 = arith.constant 0 : i32
    return %c0_i32, %c0_i32_0 : i32, i32
  }
  func.func @transform_9(%arg0: i32) -> (i32, i32) {
    %c0_i32 = arith.constant 0 : i32
    %c0_i32_0 = arith.constant 0 : i32
    %c0_i32_1 = arith.constant 0 : i32
    return %c0_i32, %c0_i32_0 : i32, i32
  }
  func.func @transform_10(%arg0: i32) -> (i32, i32, i32) {
    %c0_i32 = arith.constant 0 : i32
    %c0_i32_0 = arith.constant 0 : i32
    %c0_i32_1 = arith.constant 0 : i32
    return %arg0, %c0_i32, %c0_i32_0 : i32, i32, i32
  }
}

</mosaic_0001>

<llo_original>
// kernel: tpu_custom_call.1
$region0: #{tpu_custom_call.1}
  #allocation0 [shape = 'u32[]', space=smem, size = 0x4, offset = 0x4, fixed_abs, tag = 'smem constant byte address 0x4 - core index']
  #allocation1 [shape = 'u32[144,128]{1,0:T(1,128)}', space=vmem, size = 0x12000, scoped, tag = 'internal scratch']
  #allocation2 [shape = 'f32[4,512]{1,0:T(4,128)}', space=vmem, size = 0x2000, scoped, tag = 'scratch operand']
  #allocation3 [shape = 'f32[36,256]{1,0:T(8,128)}', space=vmem, size = 0xa000, scoped, tag = 'scratch operand']
  %s0 = inlined_call_operand.vmem [shape: f32[2,4,256], index: 0, kind: input, shape index: {}]
  %s1 = inlined_call_operand.vmem [shape: bf16[4,36], index: 1, kind: input, shape index: {}]
  %s2 = inlined_call_operand.vmem [shape: f32[4,1], index: 2, kind: input, shape index: {}]
  %s3 = inlined_call_operand.vmem [shape: bf16[4,36], index: 3, kind: input, shape index: {}]
  %s4 = inlined_call_operand.vmem [shape: f32[4,1], index: 4, kind: input, shape index: {}]
  %s5 = inlined_call_operand.vmem [shape: f32[2,4], index: 5, kind: input, shape index: {}]
  %s6 = inlined_call_operand.vmem [shape: f32[2,1], index: 6, kind: input, shape index: {}]
  %s7 = inlined_call_operand.vmem [shape: f32[4,2], index: 7, kind: input, shape index: {}]
  %s8 = inlined_call_operand.vmem [shape: f32[4,1], index: 8, kind: input, shape index: {}]
  %s9 = inlined_call_operand.vmem [shape: f32[2,256], index: 9, kind: input, shape index: {}]
  %s10 = inlined_call_operand.hbm [shape: f32[2,4,256], index: 10, kind: output, shape index: {}]
  %s11 = sld [smem:[#allocation0]]
  $region73: #{tpu_custom_call.1} parent=0
    _
  %s13 = ssub.s32 1, %s11
  %s14 = scalar_select 0, %s13, %s11
  $region1: #{tpu_custom_call.1} parent=0
    #allocation4 [shape = 'u8[8192]{0}', space=vmem, size = 0x2000, scoped, tag = 'output window, operand 0']
    #allocation5 [shape = 's32[2]{0}', space=sflag, size = 0x8, scoped, tag = 'scoped memory for tpu_custom_call.1']
    %15 = vsyncpa [#allocation5], 0
    %s16 = scalar_lea.sflag [#allocation5], 1
    %17 = vsyncpa %s16, 0
    loop: start=0, step=1, limit=4
    $region2: #{tpu_custom_call.1} parent=1 // loop_pre_header
      _
    $region3: #{tpu_custom_call.1} parent=1 // loop_header
      %s19 = sphi 0, %s23
      %p20 = scmp.ge.s32.totalorder %s19, 4
      %s29 = sphi 0, %s31
      %s32 = sphi 0, %s29
      %s33 = sphi 0, %s32
      %s49 = sphi 0, %s33
      %s53 = sphi 0, %s53
      %s55 = sphi 0, %s53
      %s56 = sphi 0, %s55
      %s70 = sphi 0, %s56
      %s74 = sphi 0, %s74
      %s76 = sphi 0, %s74
      %s77 = sphi 0, %s76
      %s91 = sphi 0, %s77
      %s95 = sphi 0, %s95
      %s97 = sphi 0, %s95
      %s98 = sphi 0, %s97
      %s112 = sphi 0, %s98
      %s116 = sphi 0, %s116
      %s118 = sphi 0, %s116
      %s119 = sphi 0, %s118
      %s133 = sphi 0, %s119
      %s137 = sphi 0, %s137
      %s139 = sphi 0, %s137
      %s140 = sphi 0, %s139
      %s154 = sphi 0, %s140
      %s158 = sphi 0, %s158
      %s160 = sphi 0, %s158
      %s161 = sphi 0, %s160
      %s175 = sphi 0, %s161
      %s179 = sphi 0, %s179
      %s181 = sphi 0, %s179
      %s182 = sphi 0, %s181
      %s196 = sphi 0, %s182
      %s200 = sphi 0, %s200
      %s202 = sphi 0, %s200
      %s203 = sphi 0, %s202
      %s217 = sphi 0, %s203
      %s221 = sphi 0, %s221
      %s223 = sphi 0, %s221
      %s224 = sphi 0, %s223
      %s238 = sphi 0, %s224
      %s244 = sphi 0, %s246
      %s247 = sphi 0, %s244
      %s248 = sphi 0, %s247
      %s264 = sphi 0, %s248
    $region4: #{tpu_custom_call.1} parent=1 // loop_header_branch
      %22 = sbr.rel (%p20) target = $region8
    $region5: #{tpu_custom_call.1} parent=1 // loop_body
      %s24 = ssub.s32 %s19, 1
      %s25 = ssub.s32 %s19, 2
      %s26 = sadd.s32 %s19, 1
      %s27 = ssub.s32 %s19, %s26
      %p28 = scmp.eq.s32.totalorder %s27, 0
      %s30 = sadd.s32 %s29, 1
      %s31 = scalar_select %p28, %s29, %s30
      %p34 = pneg %p28
      %p35 = scmp.eq.s32.totalorder %s19, 1
      %p36 = por %p34, %p35
      %p37 = scmp.ne.s32.totalorder %s29, %s32
      %p38 = scmp.eq.s32.totalorder %s19, 0
      %p39 = por %p37, %p38
      %p40 = scmp.ne.s32.totalorder %s29, %s32
      %p41 = scmp.eq.s32.totalorder %s24, 1
      %p42 = por %p40, %p41
      %p43 = scmp.ne.s32.totalorder %s32, %s33
      %p44 = scmp.eq.s32.totalorder %s24, 0
      %p45 = por %p43, %p44
      %p46 = scmp.ne.s32.totalorder %s32, %s33
      %p47 = scmp.eq.s32.totalorder %s25, 1
      %p48 = por %p46, %p47
      %p50 = scmp.ne.s32.totalorder %s33, %s49
      %p51 = scmp.eq.s32.totalorder %s25, 0
      %p52 = por %p50, %p51
      %s54 = sadd.s32 %s53, 1
      %p57 = scmp.eq.s32.totalorder %s19, 1
      %p58 = scmp.ne.s32.totalorder %s53, %s55
      %p59 = scmp.eq.s32.totalorder %s19, 0
      %p60 = por %p58, %p59
      %p61 = scmp.ne.s32.totalorder %s53, %s55
      %p62 = scmp.eq.s32.totalorder %s24, 1
      %p63 = por %p61, %p62
      %p64 = scmp.ne.s32.totalorder %s55, %s56
      %p65 = scmp.eq.s32.totalorder %s24, 0
      %p66 = por %p64, %p65
      %p67 = scmp.ne.s32.totalorder %s55, %s56
      %p68 = scmp.eq.s32.totalorder %s25, 1
      %p69 = por %p67, %p68
      %p71 = scmp.ne.s32.totalorder %s56, %s70
      %p72 = scmp.eq.s32.totalorder %s25, 0
      %p73 = por %p71, %p72
      %s75 = sadd.s32 %s74, 1
      %p78 = scmp.eq.s32.totalorder %s19, 1
      %p79 = scmp.ne.s32.totalorder %s74, %s76
      %p80 = scmp.eq.s32.totalorder %s19, 0
      %p81 = por %p79, %p80
      %p82 = scmp.ne.s32.totalorder %s74, %s76
      %p83 = scmp.eq.s32.totalorder %s24, 1
      %p84 = por %p82, %p83
      %p85 = scmp.ne.s32.totalorder %s76, %s77
      %p86 = scmp.eq.s32.totalorder %s24, 0
      %p87 = por %p85, %p86
      %p88 = scmp.ne.s32.totalorder %s76, %s77
      %p89 = scmp.eq.s32.totalorder %s25, 1
      %p90 = por %p88, %p89
      %p92 = scmp.ne.s32.totalorder %s77, %s91
      %p93 = scmp.eq.s32.totalorder %s25, 0
      %p94 = por %p92, %p93
      %s96 = sadd.s32 %s95, 1
      %p99 = scmp.eq.s32.totalorder %s19, 1
      %p100 = scmp.ne.s32.totalorder %s95, %s97
      %p101 = scmp.eq.s32.totalorder %s19, 0
      %p102 = por %p100, %p101
      %p103 = scmp.ne.s32.totalorder %s95, %s97
      %p104 = scmp.eq.s32.totalorder %s24, 1
      %p105 = por %p103, %p104
      %p106 = scmp.ne.s32.totalorder %s97, %s98
      %p107 = scmp.eq.s32.totalorder %s24, 0
      %p108 = por %p106, %p107
      %p109 = scmp.ne.s32.totalorder %s97, %s98
      %p110 = scmp.eq.s32.totalorder %s25, 1
      %p111 = por %p109, %p110
      %p113 = scmp.ne.s32.totalorder %s98, %s112
      %p114 = scmp.eq.s32.totalorder %s25, 0
      %p115 = por %p113, %p114
      %s117 = sadd.s32 %s116, 1
      %p120 = scmp.eq.s32.totalorder %s19, 1
      %p121 = scmp.ne.s32.totalorder %s116, %s118
      %p122 = scmp.eq.s32.totalorder %s19, 0
      %p123 = por %p121, %p122
      %p124 = scmp.ne.s32.totalorder %s116, %s118
      %p125 = scmp.eq.s32.totalorder %s24, 1
      %p126 = por %p124, %p125
      %p127 = scmp.ne.s32.totalorder %s118, %s119
      %p128 = scmp.eq.s32.totalorder %s24, 0
      %p129 = por %p127, %p128
      %p130 = scmp.ne.s32.totalorder %s118, %s119
      %p131 = scmp.eq.s32.totalorder %s25, 1
      %p132 = por %p130, %p131
      %p134 = scmp.ne.s32.totalorder %s119, %s133
      %p135 = scmp.eq.s32.totalorder %s25, 0
      %p136 = por %p134, %p135
      %s138 = sadd.s32 %s137, 1
      %p141 = scmp.eq.s32.totalorder %s19, 1
      %p142 = scmp.ne.s32.totalorder %s137, %s139
      %p143 = scmp.eq.s32.totalorder %s19, 0
      %p144 = por %p142, %p143
      %p145 = scmp.ne.s32.totalorder %s137, %s139
      %p146 = scmp.eq.s32.totalorder %s24, 1
      %p147 = por %p145, %p146
      %p148 = scmp.ne.s32.totalorder %s139, %s140
      %p149 = scmp.eq.s32.totalorder %s24, 0
      %p150 = por %p148, %p149
      %p151 = scmp.ne.s32.totalorder %s139, %s140
      %p152 = scmp.eq.s32.totalorder %s25, 1
      %p153 = por %p151, %p152
      %p155 = scmp.ne.s32.totalorder %s140, %s154
      %p156 = scmp.eq.s32.totalorder %s25, 0
      %p157 = por %p155, %p156
      %s159 = sadd.s32 %s158, 1
      %p162 = scmp.eq.s32.totalorder %s19, 1
      %p163 = scmp.ne.s32.totalorder %s158, %s160
      %p164 = scmp.eq.s32.totalorder %s19, 0
      %p165 = por %p163, %p164
      %p166 = scmp.ne.s32.totalorder %s158, %s160
      %p167 = scmp.eq.s32.totalorder %s24, 1
      %p168 = por %p166, %p167
      %p169 = scmp.ne.s32.totalorder %s160, %s161
      %p170 = scmp.eq.s32.totalorder %s24, 0
      %p171 = por %p169, %p170
      %p172 = scmp.ne.s32.totalorder %s160, %s161
      %p173 = scmp.eq.s32.totalorder %s25, 1
      %p174 = por %p172, %p173
      %p176 = scmp.ne.s32.totalorder %s161, %s175
      %p177 = scmp.eq.s32.totalorder %s25, 0
      %p178 = por %p176, %p177
      %s180 = sadd.s32 %s179, 1
      %p183 = scmp.eq.s32.totalorder %s19, 1
      %p184 = scmp.ne.s32.totalorder %s179, %s181
      %p185 = scmp.eq.s32.totalorder %s19, 0
      %p186 = por %p184, %p185
      %p187 = scmp.ne.s32.totalorder %s179, %s181
      %p188 = scmp.eq.s32.totalorder %s24, 1
      %p189 = por %p187, %p188
      %p190 = scmp.ne.s32.totalorder %s181, %s182
      %p191 = scmp.eq.s32.totalorder %s24, 0
      %p192 = por %p190, %p191
      %p193 = scmp.ne.s32.totalorder %s181, %s182
      %p194 = scmp.eq.s32.totalorder %s25, 1
      %p195 = por %p193, %p194
      %p197 = scmp.ne.s32.totalorder %s182, %s196
      %p198 = scmp.eq.s32.totalorder %s25, 0
      %p199 = por %p197, %p198
      %s201 = sadd.s32 %s200, 1
      %p204 = scmp.eq.s32.totalorder %s19, 1
      %p205 = scmp.ne.s32.totalorder %s200, %s202
      %p206 = scmp.eq.s32.totalorder %s19, 0
      %p207 = por %p205, %p206
      %p208 = scmp.ne.s32.totalorder %s200, %s202
      %p209 = scmp.eq.s32.totalorder %s24, 1
      %p210 = por %p208, %p209
      %p211 = scmp.ne.s32.totalorder %s202, %s203
      %p212 = scmp.eq.s32.totalorder %s24, 0
      %p213 = por %p211, %p212
      %p214 = scmp.ne.s32.totalorder %s202, %s203
      %p215 = scmp.eq.s32.totalorder %s25, 1
      %p216 = por %p214, %p215
      %p218 = scmp.ne.s32.totalorder %s203, %s217
      %p219 = scmp.eq.s32.totalorder %s25, 0
      %p220 = por %p218, %p219
      %s222 = sadd.s32 %s221, 1
      %p225 = scmp.eq.s32.totalorder %s19, 1
      %p226 = scmp.ne.s32.totalorder %s221, %s223
      %p227 = scmp.eq.s32.totalorder %s19, 0
      %p228 = por %p226, %p227
      %p229 = scmp.ne.s32.totalorder %s221, %s223
      %p230 = scmp.eq.s32.totalorder %s24, 1
      %p231 = por %p229, %p230
      %p232 = scmp.ne.s32.totalorder %s223, %s224
      %p233 = scmp.eq.s32.totalorder %s24, 0
      %p234 = por %p232, %p233
      %p235 = scmp.ne.s32.totalorder %s223, %s224
      %p236 = scmp.eq.s32.totalorder %s25, 1
      %p237 = por %p235, %p236
      %p239 = scmp.ne.s32.totalorder %s224, %s238
      %p240 = scmp.eq.s32.totalorder %s25, 0
      %p241 = por %p239, %p240
      %s242 = ssub.s32 %s19, %s26
      %p243 = scmp.eq.s32.totalorder %s242, 0
      %s245 = sadd.s32 %s244, 1
      %s246 = scalar_select %p243, %s244, %s245
      %p249 = pneg %p243
      %p250 = scmp.eq.s32.totalorder %s19, 1
      %p251 = por %p249, %p250
      %p252 = scmp.ne.s32.totalorder %s244, %s247
      %p253 = scmp.eq.s32.totalorder %s19, 0
      %p254 = por %p252, %p253
      %p255 = scmp.ne.s32.totalorder %s244, %s247
      %p256 = scmp.eq.s32.totalorder %s24, 1
      %p257 = por %p255, %p256
      %p258 = scmp.ne.s32.totalorder %s247, %s248
      %p259 = scmp.eq.s32.totalorder %s24, 0
      %p260 = por %p258, %p259
      %p261 = scmp.ne.s32.totalorder %s247, %s248
      %p262 = scmp.eq.s32.totalorder %s25, 1
      %p263 = por %p261, %p262
      %p265 = scmp.ne.s32.totalorder %s248, %s264
      %p266 = scmp.eq.s32.totalorder %s25, 0
      %p267 = por %p265, %p266
      %p268 = scmp.le.s32.totalorder 1, %s19
      %p269 = scmp.lt.s32.totalorder %s19, 3
      %p270 = pnand %p268, %p269
      %p271 = pneg %p270
      // Predicated region
      $region9: #{tpu_custom_call.1} parent=5 // pred_check
        _
      $region10: #{tpu_custom_call.1} parent=5 // pred_check_branch
        %273 = sbr.rel (%p270) target = $region12
      $region11: #{tpu_custom_call.1} parent=5 // pred_region
        %s274 = ssub.s32 %s19, 1
        // Predicated region
        $region13: #{tpu_custom_call.1} parent=11 // pred_check
          %p275 = pneg %p66
        $region14: #{tpu_custom_call.1} parent=11 // pred_check_branch
          %277 = sbr.rel (%p275) target = $region16
        $region15: #{tpu_custom_call.1} parent=11 // pred_region
          _
        $region16: #{tpu_custom_call.1} parent=11 // pred_fallthru
          _
        // Predicated region
        $region17: #{tpu_custom_call.1} parent=11 // pred_check
          %p278 = pneg %p87
        $region18: #{tpu_custom_call.1} parent=11 // pred_check_branch
          %280 = sbr.rel (%p278) target = $region20
        $region19: #{tpu_custom_call.1} parent=11 // pred_region
          _
        $region20: #{tpu_custom_call.1} parent=11 // pred_fallthru
          _
        // Predicated region
        $region21: #{tpu_custom_call.1} parent=11 // pred_check
          %p281 = pneg %p108
        $region22: #{tpu_custom_call.1} parent=11 // pred_check_branch
          %283 = sbr.rel (%p281) target = $region24
        $region23: #{tpu_custom_call.1} parent=11 // pred_region
          _
        $region24: #{tpu_custom_call.1} parent=11 // pred_fallthru
          _
        // Predicated region
        $region25: #{tpu_custom_call.1} parent=11 // pred_check
          %p284 = pneg %p129
        $region26: #{tpu_custom_call.1} parent=11 // pred_check_branch
          %286 = sbr.rel (%p284) target = $region28
        $region27: #{tpu_custom_call.1} parent=11 // pred_region
          _
        $region28: #{tpu_custom_call.1} parent=11 // pred_fallthru
          _
        // Predicated region
        $region29: #{tpu_custom_call.1} parent=11 // pred_check
          %p287 = pneg %p150
        $region30: #{tpu_custom_call.1} parent=11 // pred_check_branch
          %289 = sbr.rel (%p287) target = $region32
        $region31: #{tpu_custom_call.1} parent=11 // pred_region
          _
        $region32: #{tpu_custom_call.1} parent=11 // pred_fallthru
          _
        // Predicated region
        $region33: #{tpu_custom_call.1} parent=11 // pred_check
          %p290 = pneg %p171
        $region34: #{tpu_custom_call.1} parent=11 // pred_check_branch
          %292 = sbr.rel (%p290) target = $region36
        $region35: #{tpu_custom_call.1} parent=11 // pred_region
          _
        $region36: #{tpu_custom_call.1} parent=11 // pred_fallthru
          _
        // Predicated region
        $region37: #{tpu_custom_call.1} parent=11 // pred_check
          %p293 = pneg %p192
        $region38: #{tpu_custom_call.1} parent=11 // pred_check_branch
          %295 = sbr.rel (%p293) target = $region40
        $region39: #{tpu_custom_call.1} parent=11 // pred_region
          _
        $region40: #{tpu_custom_call.1} parent=11 // pred_fallthru
          _
        // Predicated region
        $region41: #{tpu_custom_call.1} parent=11 // pred_check
          %p296 = pneg %p213
        $region42: #{tpu_custom_call.1} parent=11 // pred_check_branch
          %298 = sbr.rel (%p296) target = $region44
        $region43: #{tpu_custom_call.1} parent=11 // pred_region
          _
        $region44: #{tpu_custom_call.1} parent=11 // pred_fallthru
          _
        // Predicated region
        $region45: #{tpu_custom_call.1} parent=11 // pred_check
          %p299 = pneg %p234
        $region46: #{tpu_custom_call.1} parent=11 // pred_check_branch
          %301 = sbr.rel (%p299) target = $region48
        $region47: #{tpu_custom_call.1} parent=11 // pred_region
          _
        $region48: #{tpu_custom_call.1} parent=11 // pred_fallthru
          _
      $region12: #{tpu_custom_call.1} parent=5 // pred_fallthru
        _
      %p302 = scmp.lt.s32.totalorder %s19, 2
      // Predicated region
      $region49: #{tpu_custom_call.1} parent=5 // pred_check
        %p303 = pneg %p302
      $region50: #{tpu_custom_call.1} parent=5 // pred_check_branch
        %305 = sbr.rel (%p303) target = $region52
      $region51: #{tpu_custom_call.1} parent=5 // pred_region
        // Predicated region
        $region53: #{tpu_custom_call.1} parent=51 // pred_check
          %p306 = pneg %p39
        $region54: #{tpu_custom_call.1} parent=51 // pred_check_branch
          %308 = sbr.rel (%p306) target = $region56
        $region55: #{tpu_custom_call.1} parent=51 // pred_region
          %p309 = scmp.lt.s32.totalorder %s19, 1
          %s310 = scalar_select %p309, %s19, 1
          %s311 = smul.addr %s310, 2
          %s312 = smul.addr %s311, 4
          %s313 = scalar_lea.vmem %s0, %s312
        $region56: #{tpu_custom_call.1} parent=51 // pred_fallthru
          _
      $region52: #{tpu_custom_call.1} parent=5 // pred_fallthru
        _
      %p314 = scmp.le.s32.totalorder 1, %s19
      %p315 = scmp.lt.s32.totalorder %s19, 3
      %p316 = pnand %p314, %p315
      %p317 = pneg %p316
      // Predicated region
      $region57: #{tpu_custom_call.1} parent=5 // pred_check
        _
      $region58: #{tpu_custom_call.1} parent=5 // pred_check_branch
        %319 = sbr.rel (%p316) target = $region60
      $region59: #{tpu_custom_call.1} parent=5 // pred_region
        %s320 = ssub.s32 %s19, 1
        %p321 = scmp.lt.s32.totalorder %s24, 1
        %s322 = scalar_select %p321, %s24, 1
        %s323 = smul.addr %s322, 2
        %s324 = smul.addr %s323, 4
        %s325 = scalar_lea.vmem %s0, %s324
        %p326 = pneg %p45
        %p327 = pneg %p42
        %p328 = pneg %p66
        %p329 = pneg %p63
        %p330 = pneg %p87
        %p331 = pneg %p84
        %p332 = pneg %p108
        %p333 = pneg %p105
        %p334 = pneg %p129
        %p335 = pneg %p126
        %p336 = pneg %p150
        %p337 = pneg %p147
        %p338 = pneg %p171
        %p339 = pneg %p168
        %p340 = pneg %p192
        %p341 = pneg %p189
        %p342 = pneg %p213
        %p343 = pneg %p210
        %p344 = pneg %p234
        %p345 = pneg %p231
        %p346 = pneg %p260
        %p347 = pneg %p257
        %s348 = sand.u32 %s247, 1
        %s349 = scalar_lea.sflag [#allocation5], %s348
        %s350 = sand.u32 %s247, 1
        %s351 = smul.addr %s350, 8
        %s352 = scalar_lea.vmem [#allocation4], %s351
        %p353 = scmp.lt.s32.totalorder %s24, 1
        %s354 = scalar_select %p353, %s24, 1
        %s355 = smul.addr %s354, 2
        %s356 = smul.addr %s355, 4
        %s357 = scalar_lea.vmem %s0, %s356
        %v359 = vld [vmem:[%s357] sm:$0xff]
        %360 = vst [vmem:[#allocation2] sm:$0xf] 0.0
        %361 = vst [vmem:[#allocation2 + $0xc] sm:$0xf] 0.0
        %v362 = vld [vmem:[%s9] ss:$2 sm:$0x3]
        %s363 = scalar_lea.vmem %s9, 1
        %v364 = vld [vmem:[%s363] ss:$2 sm:$0x3]
        %365 = vst [vmem:[#allocation2 + $0x4] sm:$0xff] %v359
        %v366 = vld [vmem:[#allocation2] sm:$0xff]
        %v367 = vld [vmem:[#allocation2 + $0x8] sm:$0xf]
        %v369 = vlaneseq
        %v370 = vshrl.u32 %v369, 7
        %v371 = vsub.s32 0, %v370
        %v372 = vrot.slane %v362, %v371
        %v373 = vlaneseq
        %v374 = vshrl.u32 %v373, 7
        %v375 = vsub.s32 1, %v374
        %v376 = vrot.slane %v362, %v375
        %v377 = vcombine.low %v372, %v376
        %378 = vrot.lane.b32.xlu0 %v377, 111
        %v379 = vpop.permute.xlu0 %378
        %v380 = vrot.slane %v379, 4
        %vm381 = vcmask 908288
        %v382 = vsel %vm381, %v380, %v379
        %v385 = vmul.f32 %v366, %v382
        %v386 = vmul.f32 %v367, %v380
        %v389 = vcombine.high %v385, %v385
        %390 = vrot.lane.b32.xlu0 %v385, 17
        %v391 = vpop.permute.xlu0 %390
        %392 = vrot.lane.b32.xlu0 %v389, 17
        %v393 = vpop.permute.xlu0 %392
        %394 = vrot.lane.b32.xlu0 %v386, 17
        %v395 = vpop.permute.xlu0 %394
        %vm396 = vcmask 138240
        %v397 = vsel %vm396, %v391, %v393
        %v398 = vsel %vm396, %v393, %v395
        %401 = vst [vmem:[#allocation3] sm:$0xf] %v397
        %402 = vst [vmem:[#allocation3 + $0x8] sm:$0xf] %v398
        %v403 = vld [vmem:[#allocation2] sm:$0xff]
        %v404 = vld [vmem:[#allocation2 + $0x8] sm:$0xf]
        %v407 = vcombine.low %v403, %v403
        %v408 = vcombine.low %v404, %v404
        %409 = vrot.lane.b32.xlu0 %v407, 16
        %v410 = vpop.permute.xlu0 %409
        %411 = vrot.lane.b32.xlu0 %v403, 16
        %v412 = vpop.permute.xlu0 %411
        %413 = vrot.lane.b32.xlu0 %v408, 16
        %v414 = vpop.permute.xlu0 %413
        %vm415 = vcmask 130048
        %v416 = vsel %vm415, %v410, %v412
        %v417 = vsel %vm415, %v412, %v414
        %420 = vst [vmem:[#allocation3] sm:$0xf0] %v416
        %421 = vst [vmem:[#allocation3 + $0x8] sm:$0xf0] %v417
        %v422 = vld [vmem:[#allocation2] sm:$0xff]
        %v423 = vld [vmem:[#allocation2 + $0x8] sm:$0xf]
        %v425 = vlaneseq
        %v426 = vshrl.u32 %v425, 7
        %v427 = vsub.s32 0, %v426
        %v428 = vrot.slane %v364, %v427
        %v429 = vlaneseq
        %v430 = vshrl.u32 %v429, 7
        %v431 = vsub.s32 1, %v430
        %v432 = vrot.slane %v364, %v431
        %v433 = vcombine.low %v428, %v432
        %434 = vrot.lane.b32.xlu0 %v433, 113
        %v435 = vpop.permute.xlu0 %434
        %v436 = vrot.slane %v435, 4
        %vm437 = vcmask 924672
        %v438 = vsel %vm437, %v436, %v435
        %v441 = vmul.f32 %v422, %v438
        %v442 = vmul.f32 %v423, %v436
        %v445 = vcombine.high %v441, %v441
        %446 = vrot.lane.b32.xlu0 %v441, 15
        %v447 = vpop.permute.xlu0 %446
        %448 = vrot.lane.b32.xlu0 %v445, 15
        %v449 = vpop.permute.xlu0 %448
        %450 = vrot.lane.b32.xlu0 %v442, 15
        %v451 = vpop.permute.xlu0 %450
        %vm452 = vcmask 121856
        %v453 = vsel %vm452, %v447, %v449
        %v454 = vsel %vm452, %v449, %v451
        %457 = vst [vmem:[#allocation3 + $0x10] sm:$0xf] %v453
        %458 = vst [vmem:[#allocation3 + $0x18] sm:$0xf] %v454
        %v459 = vld [vmem:[#allocation2] sm:$0xff]
        %v460 = vld [vmem:[#allocation2 + $0x8] sm:$0xf]
        %461 = vrot.lane.b32.xlu0 %v377, 127
        %v462 = vpop.permute.xlu0 %461
        %v463 = vrot.slane %v462, 4
        %vm464 = vcmask 1039360
        %v465 = vsel %vm464, %v463, %v462
        %v468 = vmul.f32 %v459, %v465
        %v469 = vmul.f32 %v460, %v463
        %v472 = vcombine.low %v468, %v468
        %v473 = vcombine.low %v469, %v469
        %474 = vrot.lane.b32.xlu0 %v472, 1
        %v475 = vpop.permute.xlu0 %474
        %476 = vrot.lane.b32.xlu0 %v468, 1
        %v477 = vpop.permute.xlu0 %476
        %478 = vrot.lane.b32.xlu0 %v473, 1
        %v479 = vpop.permute.xlu0 %478
        %vm480 = vcmask 7168
        %v481 = vsel %vm480, %v475, %v477
        %v482 = vsel %vm480, %v477, %v479
        %485 = vst [vmem:[#allocation3 + $0x10] sm:$0xf0] %v481
        %486 = vst [vmem:[#allocation3 + $0x18] sm:$0xf0] %v482
        %v487 = vld [vmem:[#allocation2 + $0x4] sm:$0xff]
        %v489 = vcombine.high %v487, %v487
        %491 = vst [vmem:[#allocation3 + $0x20] sm:$0xf] %v487
        %492 = vst [vmem:[#allocation3 + $0x28] sm:$0xf] %v489
        %v493 = vld [vmem:[#allocation2 + $0x4] sm:$0xff]
        %v494 = vld [vmem:[#allocation2 + $0xc] sm:$0xf]
        %495 = vrot.lane.b32.xlu0 %v433, 1
        %v496 = vpop.permute.xlu0 %495
        %v497 = vrot.slane %v496, 4
        %v498 = vsel %vm480, %v497, %v496
        %v501 = vmul.f32 %v493, %v498
        %v502 = vmul.f32 %v494, %v497
        %v505 = vcombine.low %v501, %v501
        %v506 = vcombine.low %v502, %v502
        %507 = vrot.lane.b32.xlu0 %v505, 127
        %v508 = vpop.permute.xlu0 %507
        %509 = vrot.lane.b32.xlu0 %v501, 127
        %v510 = vpop.permute.xlu0 %509
        %511 = vrot.lane.b32.xlu0 %v506, 127
        %v512 = vpop.permute.xlu0 %511
        %v513 = vsel %vm464, %v508, %v510
        %v514 = vsel %vm464, %v510, %v512
        %517 = vst [vmem:[#allocation3 + $0x20] sm:$0xf0] %v513
        %518 = vst [vmem:[#allocation3 + $0x28] sm:$0xf0] %v514
        %v519 = vld [vmem:[#allocation2 + $0x4] sm:$0xff]
        %v520 = vld [vmem:[#allocation2 + $0xc] sm:$0xf]
        %521 = vrot.lane.b32.xlu0 %v377, 15
        %v522 = vpop.permute.xlu0 %521
        %v523 = vrot.slane %v522, 4
        %v524 = vsel %vm452, %v523, %v522
        %v527 = vmul.f32 %v519, %v524
        %v528 = vmul.f32 %v520, %v523
        %v531 = vcombine.high %v527, %v527
        %532 = vrot.lane.b32.xlu0 %v527, 113
        %v533 = vpop.permute.xlu0 %532
        %534 = vrot.lane.b32.xlu0 %v531, 113
        %v535 = vpop.permute.xlu0 %534
        %536 = vrot.lane.b32.xlu0 %v528, 113
        %v537 = vpop.permute.xlu0 %536
        %v538 = vsel %vm437, %v533, %v535
        %v539 = vsel %vm437, %v535, %v537
        %542 = vst [vmem:[#allocation3 + $0x30] sm:$0xf] %v538
        %543 = vst [vmem:[#allocation3 + $0x38] sm:$0xf] %v539
        %v544 = vld [vmem:[#allocation2 + $0x4] sm:$0xff]
        %v545 = vld [vmem:[#allocation2 + $0xc] sm:$0xf]
        %v548 = vcombine.low %v544, %v544
        %v549 = vcombine.low %v545, %v545
        %550 = vrot.lane.b32.xlu0 %v548, 112
        %v551 = vpop.permute.xlu0 %550
        %552 = vrot.lane.b32.xlu0 %v544, 112
        %v553 = vpop.permute.xlu0 %552
        %554 = vrot.lane.b32.xlu0 %v549, 112
        %v555 = vpop.permute.xlu0 %554
        %vm556 = vcmask 916480
        %v557 = vsel %vm556, %v551, %v553
        %v558 = vsel %vm556, %v553, %v555
        %561 = vst [vmem:[#allocation3 + $0x30] sm:$0xf0] %v557
        %562 = vst [vmem:[#allocation3 + $0x38] sm:$0xf0] %v558
        %v563 = vld [vmem:[#allocation2 + $0x4] sm:$0xff]
        %v564 = vld [vmem:[#allocation2 + $0xc] sm:$0xf]
        %565 = vrot.lane.b32.xlu0 %v433, 17
        %v566 = vpop.permute.xlu0 %565
        %v567 = vrot.slane %v566, 4
        %v568 = vsel %vm396, %v567, %v566
        %v571 = vmul.f32 %v563, %v568
        %v572 = vmul.f32 %v564, %v567
        %v575 = vcombine.high %v571, %v571
        %576 = vrot.lane.b32.xlu0 %v571, 111
        %v577 = vpop.permute.xlu0 %576
        %578 = vrot.lane.b32.xlu0 %v575, 111
        %v579 = vpop.permute.xlu0 %578
        %580 = vrot.lane.b32.xlu0 %v572, 111
        %v581 = vpop.permute.xlu0 %580
        %v582 = vsel %vm381, %v577, %v579
        %v583 = vsel %vm381, %v579, %v581
        %586 = vst [vmem:[#allocation3 + $0x40] sm:$0xf] %v582
        %587 = vst [vmem:[#allocation3 + $0x48] sm:$0xf] %v583
        %v588 = vld [vmem:[%s1] sm:$0x3]
        %v589 = vld [vmem:[#allocation3] sm:$0xff]
        %v590 = vld [vmem:[#allocation3 + $0x8] sm:$0xff]
        %v591 = vld [vmem:[#allocation3 + $0x10] sm:$0xff]
        %v592 = vld [vmem:[#allocation3 + $0x18] sm:$0xff]
        %v593 = vld [vmem:[#allocation3 + $0x20] sm:$0xff]
        %v594 = vld [vmem:[#allocation3 + $0x28] sm:$0xff]
        %v595 = vld [vmem:[#allocation3 + $0x30] sm:$0xff]
        %v596 = vld [vmem:[#allocation3 + $0x38] sm:$0xff]
        %v597 = vld [vmem:[#allocation3 + $0x40] sm:$0xf]
        %v598 = vld [vmem:[#allocation3 + $0x48] sm:$0xf]
        %v599 = vpack.c.bf16 %v591, %v589
        %v600 = vpack.c.bf16 %v592, %v590
        %v601 = vpack.c.bf16 %v595, %v593
        %v602 = vpack.c.bf16 %v596, %v594
        %v603 = vpack.c.bf16 %v597, %v597
        %v604 = vpack.c.bf16 %v598, %v598
        %v605 = vld [vmem:[%s2] sm:$0xf]
        %607 = vset.pattern.permute.xlu0 0
        %608 = vperm.xlu0 %607, %v605
        %v609 = vpop.permute.xlu0 %608
        %vm611 = vcmask 293888
        %v613 = vsel %vm611, %v588, 0
        %vm615 = vcmask 1041408
        %v617 = vsel %vm615, %v603, 0
        %v620 = vsel %vm615, %v604, 0
        %622 = vmatprep.subr.bf16.mxu0 0
        %623 = vmatpush1.bf16.msra.mxu0 0
        %624 = vmatprep.subr.bf16.mxu0 0
        %625 = vmatpush1.bf16.msra.mxu0 0
        %626 = vmatprep.subr.bf16.mxu0 0
        %627 = vmatpush1.bf16.msra.mxu0 0
        %628 = vmatprep.subr.bf16.mxu0 0
        %629 = vmatpush1.bf16.msra.mxu0 0
        %630 = vmatprep.subr.bf16.mxu0 0
        %631 = vmatpush1.bf16.msra.mxu0 0
        %632 = vmatprep.subr.bf16.mxu0 %v620
        %633 = vmatpush1.bf16.msra.mxu0 %v617
        %634 = vmatprep.subr.bf16.mxu0 %v602
        %635 = vmatpush1.bf16.msra.mxu0 %v601
        %636 = vmatprep.subr.bf16.mxu0 %v600
        %637 = vmatpush1.bf16.msra.mxu0 %v599
        %638 = vmatprep.subr.bf16.mxu0 0
        %639 = vmatpush2.bf16.msra.mxu0 0
        %640 = vmatprep.subr.bf16.mxu0 0
        %641 = vmatpush2.bf16.msra.mxu0 0
        %642 = vmatprep.subr.bf16.mxu0 0
        %643 = vmatpush2.bf16.msra.mxu0 0
        %644 = vmatprep.subr.bf16.mxu0 0
        %645 = vmatpush2.bf16.msra.mxu0 0
        %646 = vmatprep.subr.bf16.mxu0 0
        %647 = vmatpush2.bf16.msra.mxu0 0
        %648 = vmatprep.subr.bf16.mxu0 0
        %649 = vmatpush2.bf16.msra.mxu0 0
        %650 = vmatprep.subr.bf16.mxu0 0
        %651 = vmatpush2.bf16.msra.mxu0 0
        %652 = vmatprep.subr.bf16.mxu0 0
        %653 = vmatpush2.bf16.msra.mxu0 0
        %654 = vmatprep.mubr.bf16.mxu0 0
        %655 = vmatmul.mubr.bf16.gmra.mxu0 %v613
        %v656 = vpop.f32.mrf.mxu0
        %v657 = vadd.f32 %v609, %v656
        %v658 = vpop.f32.mrf.mxu0
        %v659 = vadd.f32 %v609, %v658
        %v660 = vpop.f32.mrf.mxu0
        %v661 = vpop.f32.mrf.mxu0
        %662 = vdwg.mxu0
        %v663 = vmax.f32 %v657, 0.0
        %v664 = vmax.f32 %v659, 0.0
        %v667 = vcombine.low %v663, %v664
        %669 = vst [vmem:[#allocation2 + $0x4] sm:$0xff] %v667
        %v670 = vld [vmem:[#allocation2] sm:$0xff]
        %v671 = vld [vmem:[#allocation2 + $0x8] sm:$0xf]
        %v672 = vmul.f32 %v670, %v382
        %v673 = vmul.f32 %v671, %v380
        %v676 = vcombine.high %v672, %v672
        %677 = vrot.lane.b32.xlu0 %v672, 17
        %v678 = vpop.permute.xlu0 %677
        %679 = vrot.lane.b32.xlu0 %v676, 17
        %v680 = vpop.permute.xlu0 %679
        %681 = vrot.lane.b32.xlu0 %v673, 17
        %v682 = vpop.permute.xlu0 %681
        %v683 = vsel %vm396, %v678, %v680
        %v684 = vsel %vm396, %v680, %v682
        %687 = vst [vmem:[#allocation3] sm:$0xf] %v683
        %688 = vst [vmem:[#allocation3 + $0x8] sm:$0xf] %v684
        %v689 = vld [vmem:[#allocation2] sm:$0xff]
        %v690 = vld [vmem:[#allocation2 + $0x8] sm:$0xf]
        %v693 = vcombine.low %v689, %v689
        %v694 = vcombine.low %v690, %v690
        %695 = vrot.lane.b32.xlu0 %v693, 16
        %v696 = vpop.permute.xlu0 %695
        %697 = vrot.lane.b32.xlu0 %v689, 16
        %v698 = vpop.permute.xlu0 %697
        %699 = vrot.lane.b32.xlu0 %v694, 16
        %v700 = vpop.permute.xlu0 %699
        %v701 = vsel %vm415, %v696, %v698
        %v702 = vsel %vm415, %v698, %v700
        %705 = vst [vmem:[#allocation3] sm:$0xf0] %v701
        %706 = vst [vmem:[#allocation3 + $0x8] sm:$0xf0] %v702
        %v707 = vld [vmem:[#allocation2] sm:$0xff]
        %v708 = vld [vmem:[#allocation2 + $0x8] sm:$0xf]
        %v709 = vmul.f32 %v707, %v438
        %v710 = vmul.f32 %v708, %v436
        %v713 = vcombine.high %v709, %v709
        %714 = vrot.lane.b32.xlu0 %v709, 15
        %v715 = vpop.permute.xlu0 %714
        %716 = vrot.lane.b32.xlu0 %v713, 15
        %v717 = vpop.permute.xlu0 %716
        %718 = vrot.lane.b32.xlu0 %v710, 15
        %v719 = vpop.permute.xlu0 %718
        %v720 = vsel %vm452, %v715, %v717
        %v721 = vsel %vm452, %v717, %v719
        %724 = vst [vmem:[#allocation3 + $0x10] sm:$0xf] %v720
        %725 = vst [vmem:[#allocation3 + $0x18] sm:$0xf] %v721
        %v726 = vld [vmem:[#allocation2] sm:$0xff]
        %v727 = vld [vmem:[#allocation2 + $0x8] sm:$0xf]
        %v728 = vmul.f32 %v726, %v465
        %v729 = vmul.f32 %v727, %v463
        %v732 = vcombine.low %v728, %v728
        %v733 = vcombine.low %v729, %v729
        %734 = vrot.lane.b32.xlu0 %v732, 1
        %v735 = vpop.permute.xlu0 %734
        %736 = vrot.lane.b32.xlu0 %v728, 1
        %v737 = vpop.permute.xlu0 %736
        %738 = vrot.lane.b32.xlu0 %v733, 1
        %v739 = vpop.permute.xlu0 %738
        %v740 = vsel %vm480, %v735, %v737
        %v741 = vsel %vm480, %v737, %v739
        %744 = vst [vmem:[#allocation3 + $0x10] sm:$0xf0] %v740
        %745 = vst [vmem:[#allocation3 + $0x18] sm:$0xf0] %v741
        %v746 = vld [vmem:[#allocation2 + $0x4] sm:$0xff]
        %v748 = vcombine.high %v746, %v746
        %750 = vst [vmem:[#allocation3 + $0x20] sm:$0xf] %v746
        %751 = vst [vmem:[#allocation3 + $0x28] sm:$0xf] %v748
        %v752 = vld [vmem:[#allocation2 + $0x4] sm:$0xff]
        %v753 = vld [vmem:[#allocation2 + $0xc] sm:$0xf]
        %v754 = vmul.f32 %v752, %v498
        %v755 = vmul.f32 %v753, %v497
        %v758 = vcombine.low %v754, %v754
        %v759 = vcombine.low %v755, %v755
        %760 = vrot.lane.b32.xlu0 %v758, 127
        %v761 = vpop.permute.xlu0 %760
        %762 = vrot.lane.b32.xlu0 %v754, 127
        %v763 = vpop.permute.xlu0 %762
        %764 = vrot.lane.b32.xlu0 %v759, 127
        %v765 = vpop.permute.xlu0 %764
        %v766 = vsel %vm464, %v761, %v763
        %v767 = vsel %vm464, %v763, %v765
        %770 = vst [vmem:[#allocation3 + $0x20] sm:$0xf0] %v766
        %771 = vst [vmem:[#allocation3 + $0x28] sm:$0xf0] %v767
        %v772 = vld [vmem:[#allocation2 + $0x4] sm:$0xff]
        %v773 = vld [vmem:[#allocation2 + $0xc] sm:$0xf]
        %v774 = vmul.f32 %v772, %v524
        %v775 = vmul.f32 %v773, %v523
        %v778 = vcombine.high %v774, %v774
        %779 = vrot.lane.b32.xlu0 %v774, 113
        %v780 = vpop.permute.xlu0 %779
        %781 = vrot.lane.b32.xlu0 %v778, 113
        %v782 = vpop.permute.xlu0 %781
        %783 = vrot.lane.b32.xlu0 %v775, 113
        %v784 = vpop.permute.xlu0 %783
        %v785 = vsel %vm437, %v780, %v782
        %v786 = vsel %vm437, %v782, %v784
        %789 = vst [vmem:[#allocation3 + $0x30] sm:$0xf] %v785
        %790 = vst [vmem:[#allocation3 + $0x38] sm:$0xf] %v786
        %v791 = vld [vmem:[#allocation2 + $0x4] sm:$0xff]
        %v792 = vld [vmem:[#allocation2 + $0xc] sm:$0xf]
        %v795 = vcombine.low %v791, %v791
        %v796 = vcombine.low %v792, %v792
        %797 = vrot.lane.b32.xlu0 %v795, 112
        %v798 = vpop.permute.xlu0 %797
        %799 = vrot.lane.b32.xlu0 %v791, 112
        %v800 = vpop.permute.xlu0 %799
        %801 = vrot.lane.b32.xlu0 %v796, 112
        %v802 = vpop.permute.xlu0 %801
        %v803 = vsel %vm556, %v798, %v800
        %v804 = vsel %vm556, %v800, %v802
        %807 = vst [vmem:[#allocation3 + $0x30] sm:$0xf0] %v803
        %808 = vst [vmem:[#allocation3 + $0x38] sm:$0xf0] %v804
        %v809 = vld [vmem:[#allocation2 + $0x4] sm:$0xff]
        %v810 = vld [vmem:[#allocation2 + $0xc] sm:$0xf]
        %v811 = vmul.f32 %v809, %v568
        %v812 = vmul.f32 %v810, %v567
        %v815 = vcombine.high %v811, %v811
        %816 = vrot.lane.b32.xlu0 %v811, 111
        %v817 = vpop.permute.xlu0 %816
        %818 = vrot.lane.b32.xlu0 %v815, 111
        %v819 = vpop.permute.xlu0 %818
        %820 = vrot.lane.b32.xlu0 %v812, 111
        %v821 = vpop.permute.xlu0 %820
        %v822 = vsel %vm381, %v817, %v819
        %v823 = vsel %vm381, %v819, %v821
        %826 = vst [vmem:[#allocation3 + $0x40] sm:$0xf] %v822
        %827 = vst [vmem:[#allocation3 + $0x48] sm:$0xf] %v823
        %v828 = vld [vmem:[#allocation3] sm:$0xff]
        %v829 = vld [vmem:[#allocation3 + $0x8] sm:$0xff]
        %v830 = vld [vmem:[#allocation3 + $0x10] sm:$0xff]
        %v831 = vld [vmem:[#allocation3 + $0x18] sm:$0xff]
        %v832 = vld [vmem:[#allocation3 + $0x20] sm:$0xff]
        %v833 = vld [vmem:[#allocation3 + $0x28] sm:$0xff]
        %v834 = vld [vmem:[#allocation3 + $0x30] sm:$0xff]
        %v835 = vld [vmem:[#allocation3 + $0x38] sm:$0xff]
        %v836 = vld [vmem:[#allocation3 + $0x40] sm:$0xf]
        %v837 = vld [vmem:[#allocation3 + $0x48] sm:$0xf]
        %v838 = vadd.f32 %v828, %v829
        %839 = vadd.xlane.f32.xlu0 %v838
        %v840 = vpop.xlane.xlu0 %839
        %v841 = vadd.f32 %v830, %v831
        %842 = vadd.xlane.f32.xlu0 %v841
        %v843 = vpop.xlane.xlu0 %842
        %v844 = vadd.f32 %v832, %v833
        %845 = vadd.xlane.f32.xlu0 %v844
        %v846 = vpop.xlane.xlu0 %845
        %v847 = vadd.f32 %v834, %v835
        %848 = vadd.xlane.f32.xlu0 %v847
        %v849 = vpop.xlane.xlu0 %848
        %vm850 = vcmask 1043456
        %v851 = vsel %vm850, %v836, 0.0
        %v852 = vsel %vm850, %v837, 0.0
        %v853 = vadd.f32 %v851, %v852
        %854 = vadd.xlane.f32.xlu0 %v853
        %v855 = vpop.xlane.xlu0 %854
        %v856 = vld [vmem:[%s3] sm:$0x3]
        %v857 = vpack.c.bf16 %v843, %v840
        %v858 = vpack.c.bf16 %v849, %v846
        %v859 = vpack.c.bf16 %v855, %v855
        %v861 = vsel %vm611, %v856, 0
        %v864 = vsel %vm615, %v859, 0
        %866 = vmatprep.subr.bf16.mxu0 0
        %867 = vmatpush1.bf16.msra.mxu0 0
        %868 = vmatprep.subr.bf16.mxu0 0
        %869 = vmatpush1.bf16.msra.mxu0 0
        %870 = vmatprep.subr.bf16.mxu0 0
        %871 = vmatpush1.bf16.msra.mxu0 0
        %872 = vmatprep.subr.bf16.mxu0 0
        %873 = vmatpush1.bf16.msra.mxu0 0
        %874 = vmatprep.subr.bf16.mxu0 0
        %875 = vmatpush1.bf16.msra.mxu0 0
        %876 = vmatprep.subr.bf16.mxu0 0
        %877 = vmatpush1.bf16.msra.mxu0 %v864
        %878 = vmatprep.subr.bf16.mxu0 0
        %879 = vmatpush1.bf16.msra.mxu0 %v858
        %880 = vmatprep.subr.bf16.mxu0 0
        %881 = vmatpush1.bf16.msra.mxu0 %v857
        %882 = vmatprep.subr.bf16.mxu0 0
        %883 = vmatpush2.bf16.msra.mxu0 0
        %884 = vmatprep.subr.bf16.mxu0 0
        %885 = vmatpush2.bf16.msra.mxu0 0
        %886 = vmatprep.subr.bf16.mxu0 0
        %887 = vmatpush2.bf16.msra.mxu0 0
        %888 = vmatprep.subr.bf16.mxu0 0
        %889 = vmatpush2.bf16.msra.mxu0 0
        %890 = vmatprep.subr.bf16.mxu0 0
        %891 = vmatpush2.bf16.msra.mxu0 0
        %892 = vmatprep.subr.bf16.mxu0 0
        %893 = vmatpush2.bf16.msra.mxu0 0
        %894 = vmatprep.subr.bf16.mxu0 0
        %895 = vmatpush2.bf16.msra.mxu0 0
        %896 = vmatprep.subr.bf16.mxu0 0
        %897 = vmatpush2.bf16.msra.mxu0 0
        %898 = vmatprep.mubr.bf16.mxu0 0
        %899 = vmatmul.mubr.bf16.gmra.mxu0 %v861
        %v900 = vpop.f32.mrf.mxu0
        %v901 = vadd.f32 0.0, %v900
        %v902 = vpop.f32.mrf.mxu0
        %v903 = vpop.f32.mrf.mxu0
        %v904 = vpop.f32.mrf.mxu0
        %905 = vdwg.mxu0
        %v906 = vmul.f32 %v901, 0.00390625
        %v907 = vld [vmem:[%s4] sm:$0xf]
        %v908 = vadd.f32 %v906, %v907
        %v909 = vld [vmem:[%s5] sm:$0x3]
        %v910 = vld [vmem:[%s6] sm:$0x3]
        %vm911 = vcmask 31744
        %v913 = vsel %vm911, %v909, 0
        %v916 = vsel %vm850, %v908, 0
        %918 = vmatprep.subr.mxu0 0.0
        %919 = vmatpush1.msra.mxu0 0.0
        %920 = vmatprep.subr.mxu0 0.0
        %921 = vmatpush1.msra.mxu0 0.0
        %922 = vmatprep.subr.mxu0 0.0
        %923 = vmatpush1.msra.mxu0 0.0
        %924 = vmatprep.subr.mxu0 0.0
        %925 = vmatpush1.msra.mxu0 0.0
        %926 = vmatprep.subr.mxu0 0.0
        %927 = vmatpush1.msra.mxu0 0.0
        %928 = vmatprep.subr.mxu0 0.0
        %929 = vmatpush1.msra.mxu0 0.0
        %930 = vmatprep.subr.mxu0 0.0
        %931 = vmatpush1.msra.mxu0 0.0
        %932 = vmatprep.subr.mxu0 0.0
        %933 = vmatpush1.msra.mxu0 0.0
        %934 = vmatprep.subr.mxu0 0.0
        %935 = vmatpush1.msra.mxu0 0.0
        %936 = vmatprep.subr.mxu0 0.0
        %937 = vmatpush1.msra.mxu0 0.0
        %938 = vmatprep.subr.mxu0 0.0
        %939 = vmatpush1.msra.mxu0 0.0
        %940 = vmatprep.subr.mxu0 0.0
        %941 = vmatpush1.msra.mxu0 0.0
        %942 = vmatprep.subr.mxu0 0.0
        %943 = vmatpush1.msra.mxu0 0.0
        %944 = vmatprep.subr.mxu0 0.0
        %945 = vmatpush1.msra.mxu0 0.0
        %946 = vmatprep.subr.mxu0 0.0
        %947 = vmatpush1.msra.mxu0 0.0
        %948 = vmatprep.subr.mxu0 0.0
        %949 = vmatpush1.msra.mxu0 %v916
        %950 = vmatprep.subr.mxu0 0.0
        %951 = vmatpush2.msra.mxu0 0.0
        %952 = vmatprep.subr.mxu0 0.0
        %953 = vmatpush2.msra.mxu0 0.0
        %954 = vmatprep.subr.mxu0 0.0
        %955 = vmatpush2.msra.mxu0 0.0
        %956 = vmatprep.subr.mxu0 0.0
        %957 = vmatpush2.msra.mxu0 0.0
        %958 = vmatprep.subr.mxu0 0.0
        %959 = vmatpush2.msra.mxu0 0.0
        %960 = vmatprep.subr.mxu0 0.0
        %961 = vmatpush2.msra.mxu0 0.0
        %962 = vmatprep.subr.mxu0 0.0
        %963 = vmatpush2.msra.mxu0 0.0
        %964 = vmatprep.subr.mxu0 0.0
        %965 = vmatpush2.msra.mxu0 0.0
        %966 = vmatprep.subr.mxu0 0.0
        %967 = vmatpush2.msra.mxu0 0.0
        %968 = vmatprep.subr.mxu0 0.0
        %969 = vmatpush2.msra.mxu0 0.0
        %970 = vmatprep.subr.mxu0 0.0
        %971 = vmatpush2.msra.mxu0 0.0
        %972 = vmatprep.subr.mxu0 0.0
        %973 = vmatpush2.msra.mxu0 0.0
        %974 = vmatprep.subr.mxu0 0.0
        %975 = vmatpush2.msra.mxu0 0.0
        %976 = vmatprep.subr.mxu0 0.0
        %977 = vmatpush2.msra.mxu0 0.0
        %978 = vmatprep.subr.mxu0 0.0
        %979 = vmatpush2.msra.mxu0 0.0
        %980 = vmatprep.subr.mxu0 0.0
        %981 = vmatpush2.msra.mxu0 0.0
        %982 = vmatprep.mubr.f32.mxu0 0.0
        %983 = vmatmul.mubr.f32.gmra.mxu0 %v913
        %v984 = vpop.f32.mrf.mxu0
        %v985 = vadd.f32 %v910, %v984
        %v986 = vpop.f32.mrf.mxu0
        %987 = vdwg.mxu0
        %v988 = vmax.f32 %v985, 0.0
        %v989 = vld [vmem:[%s7] sm:$0xf]
        %v990 = vld [vmem:[%s8] sm:$0xf]
        %vm991 = vcmask 15360
        %v993 = vsel %vm991, %v989, 0
        %v996 = vsel %vm615, %v988, 0
        %998 = vmatprep.subr.mxu0 0.0
        %999 = vmatpush1.msra.mxu0 0.0
        %1000 = vmatprep.subr.mxu0 0.0
        %1001 = vmatpush1.msra.mxu0 0.0
        %1002 = vmatprep.subr.mxu0 0.0
        %1003 = vmatpush1.msra.mxu0 0.0
        %1004 = vmatprep.subr.mxu0 0.0
        %1005 = vmatpush1.msra.mxu0 0.0
        %1006 = vmatprep.subr.mxu0 0.0
        %1007 = vmatpush1.msra.mxu0 0.0
        %1008 = vmatprep.subr.mxu0 0.0
        %1009 = vmatpush1.msra.mxu0 0.0
        %1010 = vmatprep.subr.mxu0 0.0
        %1011 = vmatpush1.msra.mxu0 0.0
        %1012 = vmatprep.subr.mxu0 0.0
        %1013 = vmatpush1.msra.mxu0 0.0
        %1014 = vmatprep.subr.mxu0 0.0
        %1015 = vmatpush1.msra.mxu0 0.0
        %1016 = vmatprep.subr.mxu0 0.0
        %1017 = vmatpush1.msra.mxu0 0.0
        %1018 = vmatprep.subr.mxu0 0.0
        %1019 = vmatpush1.msra.mxu0 0.0
        %1020 = vmatprep.subr.mxu0 0.0
        %1021 = vmatpush1.msra.mxu0 0.0
        %1022 = vmatprep.subr.mxu0 0.0
        %1023 = vmatpush1.msra.mxu0 0.0
        %1024 = vmatprep.subr.mxu0 0.0
        %1025 = vmatpush1.msra.mxu0 0.0
        %1026 = vmatprep.subr.mxu0 0.0
        %1027 = vmatpush1.msra.mxu0 0.0
        %1028 = vmatprep.subr.mxu0 0.0
        %1029 = vmatpush1.msra.mxu0 %v996
        %1030 = vmatprep.subr.mxu0 0.0
        %1031 = vmatpush2.msra.mxu0 0.0
        %1032 = vmatprep.subr.mxu0 0.0
        %1033 = vmatpush2.msra.mxu0 0.0
        %1034 = vmatprep.subr.mxu0 0.0
        %1035 = vmatpush2.msra.mxu0 0.0
        %1036 = vmatprep.subr.mxu0 0.0
        %1037 = vmatpush2.msra.mxu0 0.0
        %1038 = vmatprep.subr.mxu0 0.0
        %1039 = vmatpush2.msra.mxu0 0.0
        %1040 = vmatprep.subr.mxu0 0.0
        %1041 = vmatpush2.msra.mxu0 0.0
        %1042 = vmatprep.subr.mxu0 0.0
        %1043 = vmatpush2.msra.mxu0 0.0
        %1044 = vmatprep.subr.mxu0 0.0
        %1045 = vmatpush2.msra.mxu0 0.0
        %1046 = vmatprep.subr.mxu0 0.0
        %1047 = vmatpush2.msra.mxu0 0.0
        %1048 = vmatprep.subr.mxu0 0.0
        %1049 = vmatpush2.msra.mxu0 0.0
        %1050 = vmatprep.subr.mxu0 0.0
        %1051 = vmatpush2.msra.mxu0 0.0
        %1052 = vmatprep.subr.mxu0 0.0
        %1053 = vmatpush2.msra.mxu0 0.0
        %1054 = vmatprep.subr.mxu0 0.0
        %1055 = vmatpush2.msra.mxu0 0.0
        %1056 = vmatprep.subr.mxu0 0.0
        %1057 = vmatpush2.msra.mxu0 0.0
        %1058 = vmatprep.subr.mxu0 0.0
        %1059 = vmatpush2.msra.mxu0 0.0
        %1060 = vmatprep.subr.mxu0 0.0
        %1061 = vmatpush2.msra.mxu0 0.0
        %1062 = vmatprep.mubr.f32.mxu0 0.0
        %1063 = vmatmul.mubr.f32.gmra.mxu0 %v993
        %v1064 = vpop.f32.mrf.mxu0
        %v1065 = vadd.f32 %v990, %v1064
        %v1066 = vpop.f32.mrf.mxu0
        %1067 = vdwg.mxu0
        %v1068 = vsub.f32 0.0, %v1065
        %v1069 = vmul.f32 %v1068, 1.442695
        %v1070 = vpow.pop %v1069
        %v1071 = vadd.f32 %v1070, 1.0
        %v1072 = vrcp.pop %v1071
        %v1073 = vmul.f32 1.0, %v1072
        %v1074 = vmul.f32 %v1073, %v908
        %1076 = vset.pattern.permute.xlu0 0
        %1077 = vperm.xlu0 %1076, %v1074
        %v1078 = vpop.permute.xlu0 %1077
        %v1080 = vunpack.c.l.s4 839922192
        %v1081 = vunpack.c.0.s8 %v1080
        %v1082 = vlaneseq
        %v1083 = vshrl.u32 %v1082, 7
        %v1084 = vsub.s32 %v1081, %v1083
        %v1085 = vrot.slane %v1078, %v1084
        %v1087 = vadd.f32 %v359, %v1085
        %1088 = vst [vmem:[%s352] sm:$0xff] %v1087
        %s1089 = sand.u32 %s247, 1
        %s1090 = scalar_lea.sflag [#allocation5], %s1089
        %s1091 = sand.u32 %s247, 1
        %s1092 = smul.addr %s1091, 8
        %s1093 = scalar_lea.vmem [#allocation4], %s1092
        // Predicated region
        $region61: #{tpu_custom_call.1} parent=59 // pred_check
          %p1094 = pneg %p257
        $region62: #{tpu_custom_call.1} parent=59 // pred_check_branch
          %1096 = sbr.rel (%p1094) target = $region64
        $region63: #{tpu_custom_call.1} parent=59 // pred_region
          %s1098 = ssub.s32 128, 128
          %1099 = vsyncadd %s1090, %s1098
          %s1100 = smul.addr %s24, 2
          %s1101 = smul.addr %s1100, 64
          %s1102 = scalar_lea.hbm %s10, %s1101
          %s1104 = sshll.u32 %s1093, 4
          %s1105 = int_to_ptr.vmem [resolvable:$true] %s1104
          %1107 = dma.vmem_to_hbm [thread:$0]  %s1105, 128, %s1102, %s1090
        $region64: #{tpu_custom_call.1} parent=59 // pred_fallthru
          _
      $region60: #{tpu_custom_call.1} parent=5 // pred_fallthru
        _
      %p1108 = scmp.le.s32.totalorder 2, %s19
      // Predicated region
      $region65: #{tpu_custom_call.1} parent=5 // pred_check
        %p1109 = pneg %p1108
      $region66: #{tpu_custom_call.1} parent=5 // pred_check_branch
        %1111 = sbr.rel (%p1109) target = $region68
      $region67: #{tpu_custom_call.1} parent=5 // pred_region
        %s1112 = ssub.s32 %s19, 2
        // Predicated region
        $region69: #{tpu_custom_call.1} parent=67 // pred_check
          %p1113 = pneg %p263
        $region70: #{tpu_custom_call.1} parent=67 // pred_check_branch
          %1115 = sbr.rel (%p1113) target = $region72
        $region71: #{tpu_custom_call.1} parent=67 // pred_region
          %s1116 = sand.u32 %s248, 1
          %s1117 = scalar_lea.sflag [#allocation5], %s1116
          %s1118 = sand.u32 %s248, 1
          %s1119 = smul.addr %s1118, 8
          %s1120 = scalar_lea.vmem [#allocation4], %s1119
          %1121 = dma.done %s1117, 128
        $region72: #{tpu_custom_call.1} parent=67 // pred_fallthru
          _
      $region68: #{tpu_custom_call.1} parent=5 // pred_fallthru
        _
    $region6: #{tpu_custom_call.1} parent=1 // loop_footer
      %s23 = sadd.s32 1, %s19
    $region7: #{tpu_custom_call.1} parent=1 // loop_footer_branch
      %18 = sbr.rel target = $region3
    $region8: #{tpu_custom_call.1} parent=1 // loop_exit
      _
    %1122 = vsyncpa [#allocation5], 1
    %s1123 = scalar_lea.sflag [#allocation5], 1
    %1124 = vsyncpa %s1123, 1

</llo_original>
